<compile_context>
chip_gen: v6e
topology: v6e:2x2x1
jax: 0.10.0
libtpu: 0.0.40
codegen_flags: <defaults>
</compile_context>

<pallas_src>
import functools

import jax
import jax.numpy as jnp
import numpy as np
from jax import lax
from jax.experimental import pallas as pl
from jax.experimental.pallas import tpu as pltpu


def _darkconv_kernel(x_ref, w_ref, s_ref, b_ref, o_ref, xpad_ref, p_ref, *,
                     H, W, Ho, Wo, Cin, Cout, KH, KW, pad):
    # x_ref:   (1, Cin, H, W)            input image block (NCHW, no transpose)
    # w_ref:   (Cout, KH*KW*Cin) bf16    conv weight as an im2col matrix
    # s_ref:   (Cout, 1) f32             folded BN scale
    # b_ref:   (Cout, 1) f32             folded BN bias (conv bias included)
    # o_ref:   (1, Cout, Ho*Wo) f32      lane-dense output block
    # xpad_ref:(Cin, H+2p, W+2p) f32     zero-padded input scratch
    # p_ref:   (KH*KW*Cin, Ho, Wo) f32   im2col patch scratch

    # --- zero only the padding border (interior is fully overwritten below) --
    if pad > 0:
        Hp, Wp = H + 2 * pad, W + 2 * pad
        zrow = jnp.zeros((Cin, pad, Wp), jnp.float32)
        zcol = jnp.zeros((Cin, Hp, pad), jnp.float32)
        xpad_ref[:, :pad, :] = zrow
        xpad_ref[:, H + pad:, :] = zrow
        xpad_ref[:, :, :pad] = zcol
        xpad_ref[:, :, W + pad:] = zcol

    # --- interior of the padded buffer -------------------------------------
    xpad_ref[:, pad:pad + H, pad:pad + W] = x_ref[0]

    # --- im2col: per-tap copies are aligned full (Ho, Wo) planes ------------
    for kh in range(KH):
        for kw in range(KW):
            t = kh * KW + kw
            p_ref[t * Cin:(t + 1) * Cin, :, :] = \
                xpad_ref[:, kh:kh + Ho, kw:kw + Wo]

    # One relayout to the (K, M) matmul operand, cast to bf16 for the MXU.
    patches = p_ref[...].reshape(KH * KW * Cin, Ho * Wo).astype(jnp.bfloat16)

    # --- single MXU matmul: (Cout, K) @ (K, Ho*Wo), f32 accumulation --------
    acc = jnp.dot(w_ref[...], patches, preferred_element_type=jnp.float32)

    # --- folded BatchNorm + LeakyReLU(0.1) (f32 epilogue: v5e-safe) ---------
    out = acc * s_ref[...] + b_ref[...]
    out = jnp.where(out >= 0, out, 0.1 * out)

    # Lane-dense store: last dim Ho*Wo (multiple of 128 for the demo shapes).
    o_ref[...] = out.reshape(1, Cout, Ho * Wo).astype(o_ref.dtype)


def darkconv_pallas(x, w, scale, bias, *, stride=1, padding=1):
    """DarkConv forward (inference).

    x:     (N, Cin, H, W) float32, PyTorch NCHW layout (no transposes needed).
    w:     (Cout, Cin, KH, KW) PyTorch Conv2d weight.
    scale: (Cout,) folded BatchNorm scale  = gamma / sqrt(var + eps)
    bias:  (Cout,) folded BatchNorm bias   = scale * (conv_bias - mean) + beta
    Returns (N, Cout, Ho, Wo) float32 in NCHW.
    """
    assert stride == 1, "TODO(synk): stride > 1 not implemented"
    N, Cin, H, W = x.shape
    Cout, Cin_w, KH, KW = w.shape
    assert Cin_w == Cin
    Ho = H + 2 * padding - KH + 1
    Wo = W + 2 * padding - KW + 1

    # Weight as an im2col matrix (Cout, KH*KW*Cin), K ordered (kh, kw, cin)
    # to match the kernel's patch construction; bf16 operands for the MXU.
    w_mat = jnp.transpose(w, (0, 2, 3, 1)).reshape(Cout, KH * KW * Cin)
    w_mat = w_mat.astype(jnp.bfloat16)
    s = scale.reshape(Cout, 1).astype(jnp.float32)
    b = bias.reshape(Cout, 1).astype(jnp.float32)

    kernel = functools.partial(
        _darkconv_kernel, H=H, W=W, Ho=Ho, Wo=Wo,
        Cin=Cin, Cout=Cout, KH=KH, KW=KW, pad=padding)

    out = pl.pallas_call(
        kernel,
        out_shape=jax.ShapeDtypeStruct((N, Cout, Ho * Wo), jnp.float32),
        grid_spec=pltpu.PrefetchScalarGridSpec(
            num_scalar_prefetch=0,
            grid=(N,),
            in_specs=[
                pl.BlockSpec((1, Cin, H, W), lambda n: (n, 0, 0, 0)),
                pl.BlockSpec((Cout, KH * KW * Cin), lambda n: (0, 0)),
                pl.BlockSpec((Cout, 1), lambda n: (0, 0)),
                pl.BlockSpec((Cout, 1), lambda n: (0, 0)),
            ],
            out_specs=pl.BlockSpec((1, Cout, Ho * Wo), lambda n: (n, 0, 0)),
            scratch_shapes=[
                pltpu.VMEM((Cin, H + 2 * padding, W + 2 * padding), jnp.float32),
                pltpu.VMEM((KH * KW * Cin, Ho, Wo), jnp.float32),
            ],
        ),
        compiler_params=pltpu.CompilerParams(
            dimension_semantics=("parallel",)),
    )(x, w_mat, s, b)

    # Free trailing-dim reshape back to NCHW (no transpose, no extra HBM pass).
    return out.reshape(N, Cout, Ho, Wo)


# ---------------------------------------------------------------------------
# Parameter construction: Conv2d + BatchNorm2d(eval) folded to scale/bias.
# ---------------------------------------------------------------------------
def make_darkconv_params(key, in_channels, out_channels, kernel_size, eps=1e-5):
    ks = jax.random.split(key, 6)
    w = 0.1 * jax.random.normal(
        ks[0], (out_channels, in_channels, kernel_size, kernel_size), jnp.float32)
    conv_b = 0.1 * jax.random.normal(ks[1], (out_channels,), jnp.float32)
    gamma = jax.random.uniform(ks[2], (out_channels,), jnp.float32, 0.5, 1.5)
    beta = 0.1 * jax.random.normal(ks[3], (out_channels,), jnp.float32)
    mean = 0.1 * jax.random.normal(ks[4], (out_channels,), jnp.float32)
    var = jax.random.uniform(ks[5], (out_channels,), jnp.float32, 0.5, 1.5)
    scale = gamma / jnp.sqrt(var + eps)
    bias = scale * (conv_b - mean) + beta
    return w, scale, bias


# ---------------------------------------------------------------------------
# Pure-JAX reference with the same bf16-operand / f32-accumulation numerics.
# ---------------------------------------------------------------------------
def darkconv_ref(x, w, scale, bias, *, padding=1):
    out = lax.conv_general_dilated(
        x.astype(jnp.bfloat16), w.astype(jnp.bfloat16),
        window_strides=(1, 1),
        padding=((padding, padding), (padding, padding)),
        dimension_numbers=("NCHW", "OIHW", "NCHW"),
        preferred_element_type=jnp.float32,
        precision=lax.Precision.HIGHEST)
    out = out * scale[None, :, None, None] + bias[None, :, None, None]
    return jnp.where(out >= 0, out, 0.1 * out)


if __name__ == "__main__":
    key = jax.random.PRNGKey(0)
    k_x, k_p = jax.random.split(key)

    N, Cin, H, W = 2, 4, 16, 16
    Cout, ksize = 8, 3

    x = jax.random.normal(k_x, (N, Cin, H, W), jnp.float32)
    w, scale, bias = make_darkconv_params(k_p, Cin, Cout, ksize)

    out = jax.block_until_ready(darkconv_pallas(x, w, scale, bias, padding=1))
    ref = jax.block_until_ready(darkconv_ref(x, w, scale, bias, padding=1))

    # bf16 MXU operands (per perf review) => looser tolerance than pure f32.
    np.testing.assert_allclose(np.asarray(out), np.asarray(ref),
                               rtol=2e-2, atol=2e-2)

    print("KERNEL_OK")
</pallas_src>

<mosaic_0001>
module attributes {stable_mosaic.version = 11 : i64} {
  func.func @_darkconv_kernel(%arg0: i32, %arg1: memref<1x4x16x16xf32, #tpu.memory_space<vmem>>, %arg2: memref<8x36xbf16, #tpu.memory_space<vmem>>, %arg3: memref<8x1xf32, #tpu.memory_space<vmem>>, %arg4: memref<8x1xf32, #tpu.memory_space<vmem>>, %arg5: memref<1x8x256xf32, #tpu.memory_space<vmem>>, %arg6: memref<4x18x18xf32, #tpu.memory_space<vmem>>, %arg7: memref<36x16x16xf32, #tpu.memory_space<vmem>>) attributes {dimension_semantics = [#tpu.dimension_semantics<parallel>], iteration_bounds = array<i64: 2>, scalar_prefetch = 0 : i64, scratch_operands = 2 : i64, tpu.core_type = #tpu.core_type<tc>, window_params = [{transform_indices = @transform_0, window_bounds = array<i64: 1, 4, 16, 16>}, {pipeline_mode = #tpu.pipeline_mode<synchronous>, transform_indices = @transform_1, window_bounds = array<i64: 8, 36>}, {pipeline_mode = #tpu.pipeline_mode<synchronous>, transform_indices = @transform_2, window_bounds = array<i64: 8, 1>}, {pipeline_mode = #tpu.pipeline_mode<synchronous>, transform_indices = @transform_3, window_bounds = array<i64: 8, 1>}, {transform_indices = @transform_4, window_bounds = array<i64: 1, 8, 256>}]} {
    %cst = arith.constant 0.000000e+00 : f32
    %0 = vector.broadcast %cst : f32 to vector<4x1x18xf32>
    %cst_0 = arith.constant 0.000000e+00 : f32
    %1 = vector.broadcast %cst_0 : f32 to vector<4x18x1xf32>
    %c0 = arith.constant 0 : index
    %c0_1 = arith.constant 0 : index
    %c0_2 = arith.constant 0 : index
    %2 = vector.load %arg6[%c0, %c0_1, %c0_2] : memref<4x18x18xf32, #tpu.memory_space<vmem>>, vector<4x1x18xf32>
    tpu.vector_store %arg6[%c0, %c0_1, %c0_2], %0 {strides = array<i32>} : memref<4x18x18xf32, #tpu.memory_space<vmem>>, vector<4x1x18xf32>,
    %c0_3 = arith.constant 0 : index
    %c17 = arith.constant 17 : index
    %c0_4 = arith.constant 0 : index
    %3 = vector.load %arg6[%c0_3, %c17, %c0_4] : memref<4x18x18xf32, #tpu.memory_space<vmem>>, vector<4x1x18xf32>
    tpu.vector_store %arg6[%c0_3, %c17, %c0_4], %0 {strides = array<i32>} : memref<4x18x18xf32, #tpu.memory_space<vmem>>, vector<4x1x18xf32>,
    %c0_5 = arith.constant 0 : index
    %c0_6 = arith.constant 0 : index
    %c0_7 = arith.constant 0 : index
    %4 = vector.load %arg6[%c0_5, %c0_6, %c0_7] : memref<4x18x18xf32, #tpu.memory_space<vmem>>, vector<4x18x1xf32>
    tpu.vector_store %arg6[%c0_5, %c0_6, %c0_7], %1 {strides = array<i32>} : memref<4x18x18xf32, #tpu.memory_space<vmem>>, vector<4x18x1xf32>,
    %c0_8 = arith.constant 0 : index
    %c0_9 = arith.constant 0 : index
    %c17_10 = arith.constant 17 : index
    %5 = vector.load %arg6[%c0_8, %c0_9, %c17_10] : memref<4x18x18xf32, #tpu.memory_space<vmem>>, vector<4x18x1xf32>
    tpu.vector_store %arg6[%c0_8, %c0_9, %c17_10], %1 {strides = array<i32>} : memref<4x18x18xf32, #tpu.memory_space<vmem>>, vector<4x18x1xf32>,
    %c0_11 = arith.constant 0 : index
    %c0_12 = arith.constant 0 : index
    %c0_13 = arith.constant 0 : index
    %c0_14 = arith.constant 0 : index
    %6 = vector.load %arg1[%c0_11, %c0_12, %c0_13, %c0_14] : memref<1x4x16x16xf32, #tpu.memory_space<vmem>>, vector<1x4x16x16xf32>
    %7 = vector.shape_cast %6 : vector<1x4x16x16xf32> to vector<4x16x16xf32>
    %c0_15 = arith.constant 0 : index
    %c1 = arith.constant 1 : index
    %c1_16 = arith.constant 1 : index
    %8 = vector.load %arg6[%c0_15, %c1, %c1_16] : memref<4x18x18xf32, #tpu.memory_space<vmem>>, vector<4x16x16xf32>
    tpu.vector_store %arg6[%c0_15, %c1, %c1_16], %7 {strides = array<i32>} : memref<4x18x18xf32, #tpu.memory_space<vmem>>, vector<4x16x16xf32>,
    %c0_17 = arith.constant 0 : index
    %c0_18 = arith.constant 0 : index
    %c0_19 = arith.constant 0 : index
    %9 = vector.load %arg6[%c0_17, %c0_18, %c0_19] : memref<4x18x18xf32, #tpu.memory_space<vmem>>, vector<4x16x16xf32>
    %c0_20 = arith.constant 0 : index
    %c0_21 = arith.constant 0 : index
    %c0_22 = arith.constant 0 : index
    %10 = vector.load %arg7[%c0_20, %c0_21, %c0_22] : memref<36x16x16xf32, #tpu.memory_space<vmem>>, vector<4x16x16xf32>
    tpu.vector_store %arg7[%c0_20, %c0_21, %c0_22], %9 {strides = array<i32>} : memref<36x16x16xf32, #tpu.memory_space<vmem>>, vector<4x16x16xf32>,
    %c0_23 = arith.constant 0 : index
    %c0_24 = arith.constant 0 : index
    %c1_25 = arith.constant 1 : index
    %11 = vector.load %arg6[%c0_23, %c0_24, %c1_25] : memref<4x18x18xf32, #tpu.memory_space<vmem>>, vector<4x16x16xf32>
    %c4 = arith.constant 4 : index
    %c0_26 = arith.constant 0 : index
    %c0_27 = arith.constant 0 : index
    %12 = vector.load %arg7[%c4, %c0_26, %c0_27] : memref<36x16x16xf32, #tpu.memory_space<vmem>>, vector<4x16x16xf32>
    tpu.vector_store %arg7[%c4, %c0_26, %c0_27], %11 {strides = array<i32>} : memref<36x16x16xf32, #tpu.memory_space<vmem>>, vector<4x16x16xf32>,
    %c0_28 = arith.constant 0 : index
    %c0_29 = arith.constant 0 : index
    %c2 = arith.constant 2 : index
    %13 = vector.load %arg6[%c0_28, %c0_29, %c2] : memref<4x18x18xf32, #tpu.memory_space<vmem>>, vector<4x16x16xf32>
    %c8 = arith.constant 8 : index
    %c0_30 = arith.constant 0 : index
    %c0_31 = arith.constant 0 : index
    %14 = vector.load %arg7[%c8, %c0_30, %c0_31] : memref<36x16x16xf32, #tpu.memory_space<vmem>>, vector<4x16x16xf32>
    tpu.vector_store %arg7[%c8, %c0_30, %c0_31], %13 {strides = array<i32>} : memref<36x16x16xf32, #tpu.memory_space<vmem>>, vector<4x16x16xf32>,
    %c0_32 = arith.constant 0 : index
    %c1_33 = arith.constant 1 : index
    %c0_34 = arith.constant 0 : index
    %15 = vector.load %arg6[%c0_32, %c1_33, %c0_34] : memref<4x18x18xf32, #tpu.memory_space<vmem>>, vector<4x16x16xf32>
    %c12 = arith.constant 12 : index
    %c0_35 = arith.constant 0 : index
    %c0_36 = arith.constant 0 : index
    %16 = vector.load %arg7[%c12, %c0_35, %c0_36] : memref<36x16x16xf32, #tpu.memory_space<vmem>>, vector<4x16x16xf32>
    tpu.vector_store %arg7[%c12, %c0_35, %c0_36], %15 {strides = array<i32>} : memref<36x16x16xf32, #tpu.memory_space<vmem>>, vector<4x16x16xf32>,
    %c0_37 = arith.constant 0 : index
    %c1_38 = arith.constant 1 : index
    %c1_39 = arith.constant 1 : index
    %17 = vector.load %arg6[%c0_37, %c1_38, %c1_39] : memref<4x18x18xf32, #tpu.memory_space<vmem>>, vector<4x16x16xf32>
    %c16 = arith.constant 16 : index
    %c0_40 = arith.constant 0 : index
    %c0_41 = arith.constant 0 : index
    %18 = vector.load %arg7[%c16, %c0_40, %c0_41] : memref<36x16x16xf32, #tpu.memory_space<vmem>>, vector<4x16x16xf32>
    tpu.vector_store %arg7[%c16, %c0_40, %c0_41], %17 {strides = array<i32>} : memref<36x16x16xf32, #tpu.memory_space<vmem>>, vector<4x16x16xf32>,
    %c0_42 = arith.constant 0 : index
    %c1_43 = arith.constant 1 : index
    %c2_44 = arith.constant 2 : index
    %19 = vector.load %arg6[%c0_42, %c1_43, %c2_44] : memref<4x18x18xf32, #tpu.memory_space<vmem>>, vector<4x16x16xf32>
    %c20 = arith.constant 20 : index
    %c0_45 = arith.constant 0 : index
    %c0_46 = arith.constant 0 : index
    %20 = vector.load %arg7[%c20, %c0_45, %c0_46] : memref<36x16x16xf32, #tpu.memory_space<vmem>>, vector<4x16x16xf32>
    tpu.vector_store %arg7[%c20, %c0_45, %c0_46], %19 {strides = array<i32>} : memref<36x16x16xf32, #tpu.memory_space<vmem>>, vector<4x16x16xf32>,
    %c0_47 = arith.constant 0 : index
    %c2_48 = arith.constant 2 : index
    %c0_49 = arith.constant 0 : index
    %21 = vector.load %arg6[%c0_47, %c2_48, %c0_49] : memref<4x18x18xf32, #tpu.memory_space<vmem>>, vector<4x16x16xf32>
    %c24 = arith.constant 24 : index
    %c0_50 = arith.constant 0 : index
    %c0_51 = arith.constant 0 : index
    %22 = vector.load %arg7[%c24, %c0_50, %c0_51] : memref<36x16x16xf32, #tpu.memory_space<vmem>>, vector<4x16x16xf32>
    tpu.vector_store %arg7[%c24, %c0_50, %c0_51], %21 {strides = array<i32>} : memref<36x16x16xf32, #tpu.memory_space<vmem>>, vector<4x16x16xf32>,
    %c0_52 = arith.constant 0 : index
    %c2_53 = arith.constant 2 : index
    %c1_54 = arith.constant 1 : index
    %23 = vector.load %arg6[%c0_52, %c2_53, %c1_54] : memref<4x18x18xf32, #tpu.memory_space<vmem>>, vector<4x16x16xf32>
    %c28 = arith.constant 28 : index
    %c0_55 = arith.constant 0 : index
    %c0_56 = arith.constant 0 : index
    %24 = vector.load %arg7[%c28, %c0_55, %c0_56] : memref<36x16x16xf32, #tpu.memory_space<vmem>>, vector<4x16x16xf32>
    tpu.vector_store %arg7[%c28, %c0_55, %c0_56], %23 {strides = array<i32>} : memref<36x16x16xf32, #tpu.memory_space<vmem>>, vector<4x16x16xf32>,
    %c0_57 = arith.constant 0 : index
    %c2_58 = arith.constant 2 : index
    %c2_59 = arith.constant 2 : index
    %25 = vector.load %arg6[%c0_57, %c2_58, %c2_59] : memref<4x18x18xf32, #tpu.memory_space<vmem>>, vector<4x16x16xf32>
    %c32 = arith.constant 32 : index
    %c0_60 = arith.constant 0 : index
    %c0_61 = arith.constant 0 : index
    %26 = vector.load %arg7[%c32, %c0_60, %c0_61] : memref<36x16x16xf32, #tpu.memory_space<vmem>>, vector<4x16x16xf32>
    tpu.vector_store %arg7[%c32, %c0_60, %c0_61], %25 {strides = array<i32>} : memref<36x16x16xf32, #tpu.memory_space<vmem>>, vector<4x16x16xf32>,
    %c0_62 = arith.constant 0 : index
    %c0_63 = arith.constant 0 : index
    %c0_64 = arith.constant 0 : index
    %27 = vector.load %arg7[%c0_62, %c0_63, %c0_64] : memref<36x16x16xf32, #tpu.memory_space<vmem>>, vector<36x16x16xf32>
    %28 = vector.shape_cast %27 : vector<36x16x16xf32> to vector<36x256xf32>
    %29 = arith.truncf %28 : vector<36x256xf32> to vector<36x256xbf16>
    %c0_65 = arith.constant 0 : index
    %c0_66 = arith.constant 0 : index
    %30 = vector.load %arg2[%c0_65, %c0_66] : memref<8x36xbf16, #tpu.memory_space<vmem>>, vector<8x36xbf16>
    %cst_67 = arith.constant dense<0.000000e+00> : vector<8x256xf32>
    %31 = tpu.matmul %30, %29, %cst_67 {dimension_numbers = #tpu.dot_dimension_numbers<[1], [0], [0], [1], [0, 0, 1, 1], [], []>} : vector<8x36xbf16>, vector<36x256xbf16>, vector<8x256xf32> -> vector<8x256xf32>
    %c0_68 = arith.constant 0 : index
    %c0_69 = arith.constant 0 : index
    %32 = vector.load %arg3[%c0_68, %c0_69] : memref<8x1xf32, #tpu.memory_space<vmem>>, vector<8x1xf32>
    %33 = vector.broadcast %32 : vector<8x1xf32> to vector<8x256xf32>
    %34 = arith.mulf %31, %33 : vector<8x256xf32>
    %c0_70 = arith.constant 0 : index
    %c0_71 = arith.constant 0 : index
    %35 = vector.load %arg4[%c0_70, %c0_71] : memref<8x1xf32, #tpu.memory_space<vmem>>, vector<8x1xf32>
    %36 = vector.broadcast %35 : vector<8x1xf32> to vector<8x256xf32>
    %37 = arith.addf %34, %36 : vector<8x256xf32>
    %cst_72 = arith.constant 0.000000e+00 : f32
    %38 = vector.broadcast %cst_72 : f32 to vector<8x256xf32>
    %39 = arith.cmpf oge, %37, %38 : vector<8x256xf32>
    %cst_73 = arith.constant 1.000000e-01 : f32
    %40 = vector.broadcast %cst_73 : f32 to vector<8x256xf32>
    %41 = arith.mulf %40, %37 : vector<8x256xf32>
    %42 = arith.select %39, %37, %41 : vector<8x256xi1>, vector<8x256xf32>
    %43 = vector.shape_cast %42 : vector<8x256xf32> to vector<1x8x256xf32>
    %c0_74 = arith.constant 0 : index
    %c0_75 = arith.constant 0 : index
    %c0_76 = arith.constant 0 : index
    %44 = vector.load %arg5[%c0_74, %c0_75, %c0_76] : memref<1x8x256xf32, #tpu.memory_space<vmem>>, vector<1x8x256xf32>
    tpu.vector_store %arg5[%c0_74, %c0_75, %c0_76], %43 {strides = array<i32>} : memref<1x8x256xf32, #tpu.memory_space<vmem>>, vector<1x8x256xf32>,
    return
  }
  func.func @transform_0(%arg0: i32) -> (i32, i32, i32, i32) {
    %c0_i32 = arith.constant 0 : i32
    %c0_i32_0 = arith.constant 0 : i32
    %c0_i32_1 = arith.constant 0 : i32
    %c0_i32_2 = arith.constant 0 : i32
    return %arg0, %c0_i32, %c0_i32_0, %c0_i32_1 : i32, i32, i32, i32
  }
  func.func @transform_1(%arg0: i32) -> (i32, i32) {
    %c0_i32 = arith.constant 0 : i32
    %c0_i32_0 = arith.constant 0 : i32
    %c0_i32_1 = arith.constant 0 : i32
    return %c0_i32, %c0_i32_0 : i32, i32
  }
  func.func @transform_2(%arg0: i32) -> (i32, i32) {
    %c0_i32 = arith.constant 0 : i32
    %c0_i32_0 = arith.constant 0 : i32
    %c0_i32_1 = arith.constant 0 : i32
    return %c0_i32, %c0_i32_0 : i32, i32
  }
  func.func @transform_3(%arg0: i32) -> (i32, i32) {
    %c0_i32 = arith.constant 0 : i32
    %c0_i32_0 = arith.constant 0 : i32
    %c0_i32_1 = arith.constant 0 : i32
    return %c0_i32, %c0_i32_0 : i32, i32
  }
  func.func @transform_4(%arg0: i32) -> (i32, i32, i32) {
    %c0_i32 = arith.constant 0 : i32
    %c0_i32_0 = arith.constant 0 : i32
    %c0_i32_1 = arith.constant 0 : i32
    return %arg0, %c0_i32, %c0_i32_0 : i32, i32, i32
  }
}

</mosaic_0001>

<llo_original>
// kernel: tpu_custom_call.1
$region0: #{tpu_custom_call.1}
  #allocation0 [shape = 'u32[]', space=smem, size = 0x4, offset = 0x4, fixed_abs, tag = 'smem constant byte address 0x4 - core index']
  #allocation1 [shape = 'u32[144,128]{1,0:T(1,128)}', space=vmem, size = 0x12000, scoped, tag = 'internal scratch']
  #allocation2 [shape = 'f32[4,18,18]{2,1,0:T(8,128)}', space=vmem, size = 0xc000, scoped, tag = 'scratch operand']
  #allocation3 [shape = 'f32[36,16,16]{2,1,0:T(8,128)}', space=vmem, size = 0x48000, scoped, tag = 'scratch operand']
  %s0 = inlined_call_operand.hbm [shape: f32[2,4,16,16], index: 0, kind: input, shape index: {}]
  %s1 = inlined_call_operand.vmem [shape: bf16[8,36], index: 1, kind: input, shape index: {}]
  %s2 = inlined_call_operand.vmem [shape: f32[8,1], index: 2, kind: input, shape index: {}]
  %s3 = inlined_call_operand.vmem [shape: f32[8,1], index: 3, kind: input, shape index: {}]
  %s4 = inlined_call_operand.hbm [shape: f32[2,8,256], index: 4, kind: output, shape index: {}]
  %s5 = sld [smem:[#allocation0]]
  $region53: #{tpu_custom_call.1} parent=0
    _
  %s7 = ssub.s32 1, %s5
  %s8 = scalar_select 0, %s7, %s5
  $region1: #{tpu_custom_call.1} parent=0
    #allocation4 [shape = 'u8[65536]{0}', space=vmem, size = 0x10000, scoped, tag = 'input window, operand 0']
    #allocation5 [shape = 's32[2]{0}', space=sflag, size = 0x8, scoped, tag = 'scoped memory for tpu_custom_call.1']
    #allocation6 [shape = 's32[2]{0}', space=sflag, size = 0x8, scoped, tag = 'scoped memory for tpu_custom_call.1']
    #allocation7 [shape = 'u8[16384]{0}', space=vmem, size = 0x4000, scoped, tag = 'output window, operand 0']
    %9 = vsyncpa [#allocation5], 0
    %s10 = scalar_lea.sflag [#allocation5], 1
    %11 = vsyncpa %s10, 0
    %12 = vsyncpa [#allocation6], 0
    %s13 = scalar_lea.sflag [#allocation6], 1
    %14 = vsyncpa %s13, 0
    loop: start=0, step=1, limit=4
    $region2: #{tpu_custom_call.1} parent=1 // loop_pre_header
      _
    $region3: #{tpu_custom_call.1} parent=1 // loop_header
      %s16 = sphi 0, %s20
      %p17 = scmp.ge.s32.totalorder %s16, 4
      %s26 = sphi 0, %s28
      %s29 = sphi 0, %s26
      %s30 = sphi 0, %s29
      %s46 = sphi 0, %s30
      %s50 = sphi 0, %s50
      %s52 = sphi 0, %s50
      %s53 = sphi 0, %s52
      %s67 = sphi 0, %s53
      %s71 = sphi 0, %s71
      %s73 = sphi 0, %s71
      %s74 = sphi 0, %s73
      %s88 = sphi 0, %s74
      %s92 = sphi 0, %s92
      %s94 = sphi 0, %s92
      %s95 = sphi 0, %s94
      %s109 = sphi 0, %s95
      %s115 = sphi 0, %s117
      %s118 = sphi 0, %s115
      %s119 = sphi 0, %s118
      %s135 = sphi 0, %s119
    $region4: #{tpu_custom_call.1} parent=1 // loop_header_branch
      %19 = sbr.rel (%p17) target = $region8
    $region5: #{tpu_custom_call.1} parent=1 // loop_body
      %s21 = ssub.s32 %s16, 1
      %s22 = ssub.s32 %s16, 2
      %s23 = sadd.s32 %s16, 1
      %s24 = ssub.s32 %s16, %s23
      %p25 = scmp.eq.s32.totalorder %s24, 0
      %s27 = sadd.s32 %s26, 1
      %s28 = scalar_select %p25, %s26, %s27
      %p31 = pneg %p25
      %p32 = scmp.eq.s32.totalorder %s16, 1
      %p33 = por %p31, %p32
      %p34 = scmp.ne.s32.totalorder %s26, %s29
      %p35 = scmp.eq.s32.totalorder %s16, 0
      %p36 = por %p34, %p35
      %p37 = scmp.ne.s32.totalorder %s26, %s29
      %p38 = scmp.eq.s32.totalorder %s21, 1
      %p39 = por %p37, %p38
      %p40 = scmp.ne.s32.totalorder %s29, %s30
      %p41 = scmp.eq.s32.totalorder %s21, 0
      %p42 = por %p40, %p41
      %p43 = scmp.ne.s32.totalorder %s29, %s30
      %p44 = scmp.eq.s32.totalorder %s22, 1
      %p45 = por %p43, %p44
      %p47 = scmp.ne.s32.totalorder %s30, %s46
      %p48 = scmp.eq.s32.totalorder %s22, 0
      %p49 = por %p47, %p48
      %s51 = sadd.s32 %s50, 1
      %p54 = scmp.eq.s32.totalorder %s16, 1
      %p55 = scmp.ne.s32.totalorder %s50, %s52
      %p56 = scmp.eq.s32.totalorder %s16, 0
      %p57 = por %p55, %p56
      %p58 = scmp.ne.s32.totalorder %s50, %s52
      %p59 = scmp.eq.s32.totalorder %s21, 1
      %p60 = por %p58, %p59
      %p61 = scmp.ne.s32.totalorder %s52, %s53
      %p62 = scmp.eq.s32.totalorder %s21, 0
      %p63 = por %p61, %p62
      %p64 = scmp.ne.s32.totalorder %s52, %s53
      %p65 = scmp.eq.s32.totalorder %s22, 1
      %p66 = por %p64, %p65
      %p68 = scmp.ne.s32.totalorder %s53, %s67
      %p69 = scmp.eq.s32.totalorder %s22, 0
      %p70 = por %p68, %p69
      %s72 = sadd.s32 %s71, 1
      %p75 = scmp.eq.s32.totalorder %s16, 1
      %p76 = scmp.ne.s32.totalorder %s71, %s73
      %p77 = scmp.eq.s32.totalorder %s16, 0
      %p78 = por %p76, %p77
      %p79 = scmp.ne.s32.totalorder %s71, %s73
      %p80 = scmp.eq.s32.totalorder %s21, 1
      %p81 = por %p79, %p80
      %p82 = scmp.ne.s32.totalorder %s73, %s74
      %p83 = scmp.eq.s32.totalorder %s21, 0
      %p84 = por %p82, %p83
      %p85 = scmp.ne.s32.totalorder %s73, %s74
      %p86 = scmp.eq.s32.totalorder %s22, 1
      %p87 = por %p85, %p86
      %p89 = scmp.ne.s32.totalorder %s74, %s88
      %p90 = scmp.eq.s32.totalorder %s22, 0
      %p91 = por %p89, %p90
      %s93 = sadd.s32 %s92, 1
      %p96 = scmp.eq.s32.totalorder %s16, 1
      %p97 = scmp.ne.s32.totalorder %s92, %s94
      %p98 = scmp.eq.s32.totalorder %s16, 0
      %p99 = por %p97, %p98
      %p100 = scmp.ne.s32.totalorder %s92, %s94
      %p101 = scmp.eq.s32.totalorder %s21, 1
      %p102 = por %p100, %p101
      %p103 = scmp.ne.s32.totalorder %s94, %s95
      %p104 = scmp.eq.s32.totalorder %s21, 0
      %p105 = por %p103, %p104
      %p106 = scmp.ne.s32.totalorder %s94, %s95
      %p107 = scmp.eq.s32.totalorder %s22, 1
      %p108 = por %p106, %p107
      %p110 = scmp.ne.s32.totalorder %s95, %s109
      %p111 = scmp.eq.s32.totalorder %s22, 0
      %p112 = por %p110, %p111
      %s113 = ssub.s32 %s16, %s23
      %p114 = scmp.eq.s32.totalorder %s113, 0
      %s116 = sadd.s32 %s115, 1
      %s117 = scalar_select %p114, %s115, %s116
      %p120 = pneg %p114
      %p121 = scmp.eq.s32.totalorder %s16, 1
      %p122 = por %p120, %p121
      %p123 = scmp.ne.s32.totalorder %s115, %s118
      %p124 = scmp.eq.s32.totalorder %s16, 0
      %p125 = por %p123, %p124
      %p126 = scmp.ne.s32.totalorder %s115, %s118
      %p127 = scmp.eq.s32.totalorder %s21, 1
      %p128 = por %p126, %p127
      %p129 = scmp.ne.s32.totalorder %s118, %s119
      %p130 = scmp.eq.s32.totalorder %s21, 0
      %p131 = por %p129, %p130
      %p132 = scmp.ne.s32.totalorder %s118, %s119
      %p133 = scmp.eq.s32.totalorder %s22, 1
      %p134 = por %p132, %p133
      %p136 = scmp.ne.s32.totalorder %s119, %s135
      %p137 = scmp.eq.s32.totalorder %s22, 0
      %p138 = por %p136, %p137
      %p139 = scmp.le.s32.totalorder 1, %s16
      %p140 = scmp.lt.s32.totalorder %s16, 3
      %p141 = pnand %p139, %p140
      %p142 = pneg %p141
      // Predicated region
      $region9: #{tpu_custom_call.1} parent=5 // pred_check
        _
      $region10: #{tpu_custom_call.1} parent=5 // pred_check_branch
        %144 = sbr.rel (%p141) target = $region12
      $region11: #{tpu_custom_call.1} parent=5 // pred_region
        %s145 = ssub.s32 %s16, 1
        // Predicated region
        $region13: #{tpu_custom_call.1} parent=11 // pred_check
          %p146 = pneg %p63
        $region14: #{tpu_custom_call.1} parent=11 // pred_check_branch
          %148 = sbr.rel (%p146) target = $region16
        $region15: #{tpu_custom_call.1} parent=11 // pred_region
          _
        $region16: #{tpu_custom_call.1} parent=11 // pred_fallthru
          _
        // Predicated region
        $region17: #{tpu_custom_call.1} parent=11 // pred_check
          %p149 = pneg %p84
        $region18: #{tpu_custom_call.1} parent=11 // pred_check_branch
          %151 = sbr.rel (%p149) target = $region20
        $region19: #{tpu_custom_call.1} parent=11 // pred_region
          _
        $region20: #{tpu_custom_call.1} parent=11 // pred_fallthru
          _
        // Predicated region
        $region21: #{tpu_custom_call.1} parent=11 // pred_check
          %p152 = pneg %p105
        $region22: #{tpu_custom_call.1} parent=11 // pred_check_branch
          %154 = sbr.rel (%p152) target = $region24
        $region23: #{tpu_custom_call.1} parent=11 // pred_region
          _
        $region24: #{tpu_custom_call.1} parent=11 // pred_fallthru
          _
      $region12: #{tpu_custom_call.1} parent=5 // pred_fallthru
        _
      %p155 = scmp.lt.s32.totalorder %s16, 2
      // Predicated region
      $region25: #{tpu_custom_call.1} parent=5 // pred_check
        %p156 = pneg %p155
      $region26: #{tpu_custom_call.1} parent=5 // pred_check_branch
        %158 = sbr.rel (%p156) target = $region28
      $region27: #{tpu_custom_call.1} parent=5 // pred_region
        // Predicated region
        $region29: #{tpu_custom_call.1} parent=27 // pred_check
          %p159 = pneg %p36
        $region30: #{tpu_custom_call.1} parent=27 // pred_check_branch
          %161 = sbr.rel (%p159) target = $region32
        $region31: #{tpu_custom_call.1} parent=27 // pred_region
          %s162 = sand.u32 %s26, 1
          %s163 = scalar_lea.sflag [#allocation5], %s162
          %s164 = sand.u32 %s26, 1
          %s165 = smul.addr %s164, 64
          %s166 = scalar_lea.vmem [#allocation4], %s165
          %s168 = ssub.s32 1024, 1024
          %169 = vsyncadd %s163, %s168
          %s170 = smul.addr %s16, 8
          %s171 = smul.addr %s170, 128
          %s172 = scalar_lea.hbm %s0, %s171
          %s173 = sshll.u32 %s166, 4
          %s174 = int_to_ptr.vmem [resolvable:$true] %s173
          %179 = dma.hbm_to_vmem [thread:$0]  %s172, 1024, %s174, %s163, 128, 128, 8
        $region32: #{tpu_custom_call.1} parent=27 // pred_fallthru
          _
      $region28: #{tpu_custom_call.1} parent=5 // pred_fallthru
        _
      %p180 = scmp.le.s32.totalorder 1, %s16
      %p181 = scmp.lt.s32.totalorder %s16, 3
      %p182 = pnand %p180, %p181
      %p183 = pneg %p182
      // Predicated region
      $region33: #{tpu_custom_call.1} parent=5 // pred_check
        _
      $region34: #{tpu_custom_call.1} parent=5 // pred_check_branch
        %185 = sbr.rel (%p182) target = $region36
      $region35: #{tpu_custom_call.1} parent=5 // pred_region
        %s186 = ssub.s32 %s16, 1
        %s187 = sand.u32 %s29, 1
        %s188 = scalar_lea.sflag [#allocation5], %s187
        %s189 = sand.u32 %s29, 1
        %s190 = smul.addr %s189, 64
        %s191 = scalar_lea.vmem [#allocation4], %s190
        // Predicated region
        $region37: #{tpu_custom_call.1} parent=35 // pred_check
          %p192 = pneg %p42
        $region38: #{tpu_custom_call.1} parent=35 // pred_check_branch
          %194 = sbr.rel (%p192) target = $region40
        $region39: #{tpu_custom_call.1} parent=35 // pred_region
          %195 = dma.done %s188, 1024
        $region40: #{tpu_custom_call.1} parent=35 // pred_fallthru
          _
        %s196 = sand.u32 %s29, 1
        %s197 = scalar_lea.sflag [#allocation5], %s196
        %s198 = sand.u32 %s29, 1
        %s199 = smul.addr %s198, 64
        %s200 = scalar_lea.vmem [#allocation4], %s199
        %p201 = pneg %p42
        %p202 = pneg %p39
        %p203 = pneg %p63
        %p204 = pneg %p60
        %p205 = pneg %p84
        %p206 = pneg %p81
        %p207 = pneg %p105
        %p208 = pneg %p102
        %p209 = pneg %p131
        %p210 = pneg %p128
        %s211 = sand.u32 %s118, 1
        %s212 = scalar_lea.sflag [#allocation6], %s211
        %s213 = sand.u32 %s118, 1
        %s214 = smul.addr %s213, 16
        %s215 = scalar_lea.vmem [#allocation7], %s214
        %vm217 = vcmask 139264
        %218 = vst.msk [vmem:[#allocation2] sm:$0x1] %vm217, 0.0
        %219 = vst.msk [vmem:[#allocation2 + $0x18] sm:$0x1] %vm217, 0.0
        %220 = vst.msk [vmem:[#allocation2 + $0x30] sm:$0x1] %vm217, 0.0
        %221 = vst.msk [vmem:[#allocation2 + $0x48] sm:$0x1] %vm217, 0.0
        %222 = vst.msk [vmem:[#allocation2 + $0x11] sm:$0x1] %vm217, 0.0
        %223 = vst.msk [vmem:[#allocation2 + $0x29] sm:$0x1] %vm217, 0.0
        %224 = vst.msk [vmem:[#allocation2 + $0x41] sm:$0x1] %vm217, 0.0
        %225 = vst.msk [vmem:[#allocation2 + $0x59] sm:$0x1] %vm217, 0.0
        %vm226 = vcmask 7168
        %227 = vst.msk [vmem:[#allocation2] sm:$0xff] %vm226, 0.0
        %228 = vst.msk [vmem:[#allocation2 + $0x8] sm:$0xff] %vm226, 0.0
        %vm229 = vcmask 1024
        %230 = vst.msk [vmem:[#allocation2 + $0x10] sm:$0x3] %vm229, 0.0
        %231 = vst.msk [vmem:[#allocation2 + $0x18] sm:$0xff] %vm226, 0.0
        %232 = vst.msk [vmem:[#allocation2 + $0x20] sm:$0xff] %vm226, 0.0
        %233 = vst.msk [vmem:[#allocation2 + $0x28] sm:$0x3] %vm229, 0.0
        %234 = vst.msk [vmem:[#allocation2 + $0x30] sm:$0xff] %vm226, 0.0
        %235 = vst.msk [vmem:[#allocation2 + $0x38] sm:$0xff] %vm226, 0.0
        %236 = vst.msk [vmem:[#allocation2 + $0x40] sm:$0x3] %vm229, 0.0
        %237 = vst.msk [vmem:[#allocation2 + $0x48] sm:$0xff] %vm226, 0.0
        %238 = vst.msk [vmem:[#allocation2 + $0x50] sm:$0xff] %vm226, 0.0
        %239 = vst.msk [vmem:[#allocation2 + $0x58] sm:$0x3] %vm229, 0.0
        %vm240 = vcmask 146568
        %241 = vst.msk [vmem:[#allocation2] sm:$0xff] %vm240, 0.0
        %242 = vst.msk [vmem:[#allocation2 + $0x8] sm:$0xff] %vm240, 0.0
        %vm243 = vcmask 140424
        %244 = vst.msk [vmem:[#allocation2 + $0x10] sm:$0x3] %vm243, 0.0
        %245 = vst.msk [vmem:[#allocation2 + $0x18] sm:$0xff] %vm240, 0.0
        %246 = vst.msk [vmem:[#allocation2 + $0x20] sm:$0xff] %vm240, 0.0
        %247 = vst.msk [vmem:[#allocation2 + $0x28] sm:$0x3] %vm243, 0.0
        %248 = vst.msk [vmem:[#allocation2 + $0x30] sm:$0xff] %vm240, 0.0
        %249 = vst.msk [vmem:[#allocation2 + $0x38] sm:$0xff] %vm240, 0.0
        %250 = vst.msk [vmem:[#allocation2 + $0x40] sm:$0x3] %vm243, 0.0
        %251 = vst.msk [vmem:[#allocation2 + $0x48] sm:$0xff] %vm240, 0.0
        %252 = vst.msk [vmem:[#allocation2 + $0x50] sm:$0xff] %vm240, 0.0
        %253 = vst.msk [vmem:[#allocation2 + $0x58] sm:$0x3] %vm243, 0.0
        %v254 = vld [vmem:[%s191] sm:$0xff]
        %v255 = vld [vmem:[%s191 + $0x8] sm:$0xff]
        %v256 = vld [vmem:[%s191 + $0x10] sm:$0xff]
        %v257 = vld [vmem:[%s191 + $0x18] sm:$0xff]
        %v258 = vld [vmem:[%s191 + $0x20] sm:$0xff]
        %v259 = vld [vmem:[%s191 + $0x28] sm:$0xff]
        %v260 = vld [vmem:[%s191 + $0x30] sm:$0xff]
        %v261 = vld [vmem:[%s191 + $0x38] sm:$0xff]
        %270 = vrot.lane.b32.xlu0 %v254, 1
        %v271 = vpop.permute.xlu0 %270
        %272 = vrot.lane.b32.xlu0 %v255, 1
        %v273 = vpop.permute.xlu0 %272
        %274 = vrot.lane.b32.xlu0 %v256, 1
        %v275 = vpop.permute.xlu0 %274
        %276 = vrot.lane.b32.xlu0 %v257, 1
        %v277 = vpop.permute.xlu0 %276
        %278 = vrot.lane.b32.xlu0 %v258, 1
        %v279 = vpop.permute.xlu0 %278
        %280 = vrot.lane.b32.xlu0 %v259, 1
        %v281 = vpop.permute.xlu0 %280
        %282 = vrot.lane.b32.xlu0 %v260, 1
        %v283 = vpop.permute.xlu0 %282
        %284 = vrot.lane.b32.xlu0 %v261, 1
        %v285 = vpop.permute.xlu0 %284
        %vm294 = vcmask 138248
        %295 = vst.msk [vmem:[#allocation2 + $0x1] sm:$0xff] %vm294, %v271
        %296 = vst.msk [vmem:[#allocation2 + $0x9] sm:$0xff] %vm294, %v273
        %297 = vst.msk [vmem:[#allocation2 + $0x19] sm:$0xff] %vm294, %v275
        %298 = vst.msk [vmem:[#allocation2 + $0x21] sm:$0xff] %vm294, %v277
        %299 = vst.msk [vmem:[#allocation2 + $0x31] sm:$0xff] %vm294, %v279
        %300 = vst.msk [vmem:[#allocation2 + $0x39] sm:$0xff] %vm294, %v281
        %301 = vst.msk [vmem:[#allocation2 + $0x49] sm:$0xff] %vm294, %v283
        %302 = vst.msk [vmem:[#allocation2 + $0x51] sm:$0xff] %vm294, %v285
        %v303 = vld [vmem:[#allocation2] sm:$0xff]
        %v304 = vld [vmem:[#allocation2 + $0x8] sm:$0xff]
        %v305 = vld [vmem:[#allocation2 + $0x18] sm:$0xff]
        %v306 = vld [vmem:[#allocation2 + $0x20] sm:$0xff]
        %v307 = vld [vmem:[#allocation2 + $0x30] sm:$0xff]
        %v308 = vld [vmem:[#allocation2 + $0x38] sm:$0xff]
        %v309 = vld [vmem:[#allocation2 + $0x48] sm:$0xff]
        %v310 = vld [vmem:[#allocation2 + $0x50] sm:$0xff]
        %vm311 = vcmask 130048
        %312 = vst.msk [vmem:[#allocation3] sm:$0xff] %vm311, %v303
        %313 = vst.msk [vmem:[#allocation3 + $0x8] sm:$0xff] %vm311, %v304
        %314 = vst.msk [vmem:[#allocation3 + $0x10] sm:$0xff] %vm311, %v305
        %315 = vst.msk [vmem:[#allocation3 + $0x18] sm:$0xff] %vm311, %v306
        %316 = vst.msk [vmem:[#allocation3 + $0x20] sm:$0xff] %vm311, %v307
        %317 = vst.msk [vmem:[#allocation3 + $0x28] sm:$0xff] %vm311, %v308
        %318 = vst.msk [vmem:[#allocation3 + $0x30] sm:$0xff] %vm311, %v309
        %319 = vst.msk [vmem:[#allocation3 + $0x38] sm:$0xff] %vm311, %v310
        %v320 = vld [vmem:[#allocation2] sm:$0xff]
        %v321 = vld [vmem:[#allocation2 + $0x8] sm:$0xff]
        %v322 = vld [vmem:[#allocation2 + $0x18] sm:$0xff]
        %v323 = vld [vmem:[#allocation2 + $0x20] sm:$0xff]
        %v324 = vld [vmem:[#allocation2 + $0x30] sm:$0xff]
        %v325 = vld [vmem:[#allocation2 + $0x38] sm:$0xff]
        %v326 = vld [vmem:[#allocation2 + $0x48] sm:$0xff]
        %v327 = vld [vmem:[#allocation2 + $0x50] sm:$0xff]
        %336 = vrot.lane.b32.xlu0 %v320, 127
        %v337 = vpop.permute.xlu0 %336
        %338 = vrot.lane.b32.xlu0 %v321, 127
        %v339 = vpop.permute.xlu0 %338
        %340 = vrot.lane.b32.xlu0 %v322, 127
        %v341 = vpop.permute.xlu0 %340
        %342 = vrot.lane.b32.xlu0 %v323, 127
        %v343 = vpop.permute.xlu0 %342
        %344 = vrot.lane.b32.xlu0 %v324, 127
        %v345 = vpop.permute.xlu0 %344
        %346 = vrot.lane.b32.xlu0 %v325, 127
        %v347 = vpop.permute.xlu0 %346
        %348 = vrot.lane.b32.xlu0 %v326, 127
        %v349 = vpop.permute.xlu0 %348
        %350 = vrot.lane.b32.xlu0 %v327, 127
        %v351 = vpop.permute.xlu0 %350
        %s360 = scalar_lea.vmem [#allocation3], 64
        %361 = vst.msk [vmem:[%s360] sm:$0xff] %vm311, %v337
        %362 = vst.msk [vmem:[%s360 + $0x8] sm:$0xff] %vm311, %v339
        %363 = vst.msk [vmem:[%s360 + $0x10] sm:$0xff] %vm311, %v341
        %364 = vst.msk [vmem:[%s360 + $0x18] sm:$0xff] %vm311, %v343
        %365 = vst.msk [vmem:[%s360 + $0x20] sm:$0xff] %vm311, %v345
        %366 = vst.msk [vmem:[%s360 + $0x28] sm:$0xff] %vm311, %v347
        %367 = vst.msk [vmem:[%s360 + $0x30] sm:$0xff] %vm311, %v349
        %368 = vst.msk [vmem:[%s360 + $0x38] sm:$0xff] %vm311, %v351
        %v369 = vld [vmem:[#allocation2] sm:$0xff]
        %v370 = vld [vmem:[#allocation2 + $0x8] sm:$0xff]
        %v371 = vld [vmem:[#allocation2 + $0x18] sm:$0xff]
        %v372 = vld [vmem:[#allocation2 + $0x20] sm:$0xff]
        %v373 = vld [vmem:[#allocation2 + $0x30] sm:$0xff]
        %v374 = vld [vmem:[#allocation2 + $0x38] sm:$0xff]
        %v375 = vld [vmem:[#allocation2 + $0x48] sm:$0xff]
        %v376 = vld [vmem:[#allocation2 + $0x50] sm:$0xff]
        %385 = vrot.lane.b32.xlu0 %v369, 126
        %v386 = vpop.permute.xlu0 %385
        %387 = vrot.lane.b32.xlu0 %v370, 126
        %v388 = vpop.permute.xlu0 %387
        %389 = vrot.lane.b32.xlu0 %v371, 126
        %v390 = vpop.permute.xlu0 %389
        %391 = vrot.lane.b32.xlu0 %v372, 126
        %v392 = vpop.permute.xlu0 %391
        %393 = vrot.lane.b32.xlu0 %v373, 126
        %v394 = vpop.permute.xlu0 %393
        %395 = vrot.lane.b32.xlu0 %v374, 126
        %v396 = vpop.permute.xlu0 %395
        %397 = vrot.lane.b32.xlu0 %v375, 126
        %v398 = vpop.permute.xlu0 %397
        %399 = vrot.lane.b32.xlu0 %v376, 126
        %v400 = vpop.permute.xlu0 %399
        %s409 = scalar_lea.vmem [#allocation3], 128
        %410 = vst.msk [vmem:[%s409] sm:$0xff] %vm311, %v386
        %411 = vst.msk [vmem:[%s409 + $0x8] sm:$0xff] %vm311, %v388
        %412 = vst.msk [vmem:[%s409 + $0x10] sm:$0xff] %vm311, %v390
        %413 = vst.msk [vmem:[%s409 + $0x18] sm:$0xff] %vm311, %v392
        %414 = vst.msk [vmem:[%s409 + $0x20] sm:$0xff] %vm311, %v394
        %415 = vst.msk [vmem:[%s409 + $0x28] sm:$0xff] %vm311, %v396
        %416 = vst.msk [vmem:[%s409 + $0x30] sm:$0xff] %vm311, %v398
        %417 = vst.msk [vmem:[%s409 + $0x38] sm:$0xff] %vm311, %v400
        %v418 = vld [vmem:[#allocation2 + $0x1] sm:$0xff]
        %v419 = vld [vmem:[#allocation2 + $0x9] sm:$0xff]
        %v420 = vld [vmem:[#allocation2 + $0x19] sm:$0xff]
        %v421 = vld [vmem:[#allocation2 + $0x21] sm:$0xff]
        %v422 = vld [vmem:[#allocation2 + $0x31] sm:$0xff]
        %v423 = vld [vmem:[#allocation2 + $0x39] sm:$0xff]
        %v424 = vld [vmem:[#allocation2 + $0x49] sm:$0xff]
        %v425 = vld [vmem:[#allocation2 + $0x51] sm:$0xff]
        %s426 = scalar_lea.vmem [#allocation3], 192
        %427 = vst.msk [vmem:[%s426] sm:$0xff] %vm311, %v418
        %428 = vst.msk [vmem:[%s426 + $0x8] sm:$0xff] %vm311, %v419
        %429 = vst.msk [vmem:[%s426 + $0x10] sm:$0xff] %vm311, %v420
        %430 = vst.msk [vmem:[%s426 + $0x18] sm:$0xff] %vm311, %v421
        %431 = vst.msk [vmem:[%s426 + $0x20] sm:$0xff] %vm311, %v422
        %432 = vst.msk [vmem:[%s426 + $0x28] sm:$0xff] %vm311, %v423
        %433 = vst.msk [vmem:[%s426 + $0x30] sm:$0xff] %vm311, %v424
        %434 = vst.msk [vmem:[%s426 + $0x38] sm:$0xff] %vm311, %v425
        %v435 = vld [vmem:[#allocation2 + $0x1] sm:$0xff]
        %v436 = vld [vmem:[#allocation2 + $0x9] sm:$0xff]
        %v437 = vld [vmem:[#allocation2 + $0x19] sm:$0xff]
        %v438 = vld [vmem:[#allocation2 + $0x21] sm:$0xff]
        %v439 = vld [vmem:[#allocation2 + $0x31] sm:$0xff]
        %v440 = vld [vmem:[#allocation2 + $0x39] sm:$0xff]
        %v441 = vld [vmem:[#allocation2 + $0x49] sm:$0xff]
        %v442 = vld [vmem:[#allocation2 + $0x51] sm:$0xff]
        %451 = vrot.lane.b32.xlu0 %v435, 127
        %v452 = vpop.permute.xlu0 %451
        %453 = vrot.lane.b32.xlu0 %v436, 127
        %v454 = vpop.permute.xlu0 %453
        %455 = vrot.lane.b32.xlu0 %v437, 127
        %v456 = vpop.permute.xlu0 %455
        %457 = vrot.lane.b32.xlu0 %v438, 127
        %v458 = vpop.permute.xlu0 %457
        %459 = vrot.lane.b32.xlu0 %v439, 127
        %v460 = vpop.permute.xlu0 %459
        %461 = vrot.lane.b32.xlu0 %v440, 127
        %v462 = vpop.permute.xlu0 %461
        %463 = vrot.lane.b32.xlu0 %v441, 127
        %v464 = vpop.permute.xlu0 %463
        %465 = vrot.lane.b32.xlu0 %v442, 127
        %v466 = vpop.permute.xlu0 %465
        %s475 = scalar_lea.vmem [#allocation3], 256
        %476 = vst.msk [vmem:[%s475] sm:$0xff] %vm311, %v452
        %477 = vst.msk [vmem:[%s475 + $0x8] sm:$0xff] %vm311, %v454
        %478 = vst.msk [vmem:[%s475 + $0x10] sm:$0xff] %vm311, %v456
        %479 = vst.msk [vmem:[%s475 + $0x18] sm:$0xff] %vm311, %v458
        %480 = vst.msk [vmem:[%s475 + $0x20] sm:$0xff] %vm311, %v460
        %481 = vst.msk [vmem:[%s475 + $0x28] sm:$0xff] %vm311, %v462
        %482 = vst.msk [vmem:[%s475 + $0x30] sm:$0xff] %vm311, %v464
        %483 = vst.msk [vmem:[%s475 + $0x38] sm:$0xff] %vm311, %v466
        %v484 = vld [vmem:[#allocation2 + $0x1] sm:$0xff]
        %v485 = vld [vmem:[#allocation2 + $0x9] sm:$0xff]
        %v486 = vld [vmem:[#allocation2 + $0x19] sm:$0xff]
        %v487 = vld [vmem:[#allocation2 + $0x21] sm:$0xff]
        %v488 = vld [vmem:[#allocation2 + $0x31] sm:$0xff]
        %v489 = vld [vmem:[#allocation2 + $0x39] sm:$0xff]
        %v490 = vld [vmem:[#allocation2 + $0x49] sm:$0xff]
        %v491 = vld [vmem:[#allocation2 + $0x51] sm:$0xff]
        %500 = vrot.lane.b32.xlu0 %v484, 126
        %v501 = vpop.permute.xlu0 %500
        %502 = vrot.lane.b32.xlu0 %v485, 126
        %v503 = vpop.permute.xlu0 %502
        %504 = vrot.lane.b32.xlu0 %v486, 126
        %v505 = vpop.permute.xlu0 %504
        %506 = vrot.lane.b32.xlu0 %v487, 126
        %v507 = vpop.permute.xlu0 %506
        %508 = vrot.lane.b32.xlu0 %v488, 126
        %v509 = vpop.permute.xlu0 %508
        %510 = vrot.lane.b32.xlu0 %v489, 126
        %v511 = vpop.permute.xlu0 %510
        %512 = vrot.lane.b32.xlu0 %v490, 126
        %v513 = vpop.permute.xlu0 %512
        %514 = vrot.lane.b32.xlu0 %v491, 126
        %v515 = vpop.permute.xlu0 %514
        %s524 = scalar_lea.vmem [#allocation3], 320
        %525 = vst.msk [vmem:[%s524] sm:$0xff] %vm311, %v501
        %526 = vst.msk [vmem:[%s524 + $0x8] sm:$0xff] %vm311, %v503
        %527 = vst.msk [vmem:[%s524 + $0x10] sm:$0xff] %vm311, %v505
        %528 = vst.msk [vmem:[%s524 + $0x18] sm:$0xff] %vm311, %v507
        %529 = vst.msk [vmem:[%s524 + $0x20] sm:$0xff] %vm311, %v509
        %530 = vst.msk [vmem:[%s524 + $0x28] sm:$0xff] %vm311, %v511
        %531 = vst.msk [vmem:[%s524 + $0x30] sm:$0xff] %vm311, %v513
        %532 = vst.msk [vmem:[%s524 + $0x38] sm:$0xff] %vm311, %v515
        %v533 = vld [vmem:[#allocation2 + $0x2] sm:$0xff]
        %v534 = vld [vmem:[#allocation2 + $0xa] sm:$0xff]
        %v535 = vld [vmem:[#allocation2 + $0x1a] sm:$0xff]
        %v536 = vld [vmem:[#allocation2 + $0x22] sm:$0xff]
        %v537 = vld [vmem:[#allocation2 + $0x32] sm:$0xff]
        %v538 = vld [vmem:[#allocation2 + $0x3a] sm:$0xff]
        %v539 = vld [vmem:[#allocation2 + $0x4a] sm:$0xff]
        %v540 = vld [vmem:[#allocation2 + $0x52] sm:$0xff]
        %s541 = scalar_lea.vmem [#allocation3], 384
        %542 = vst.msk [vmem:[%s541] sm:$0xff] %vm311, %v533
        %543 = vst.msk [vmem:[%s541 + $0x8] sm:$0xff] %vm311, %v534
        %544 = vst.msk [vmem:[%s541 + $0x10] sm:$0xff] %vm311, %v535
        %545 = vst.msk [vmem:[%s541 + $0x18] sm:$0xff] %vm311, %v536
        %546 = vst.msk [vmem:[%s541 + $0x20] sm:$0xff] %vm311, %v537
        %547 = vst.msk [vmem:[%s541 + $0x28] sm:$0xff] %vm311, %v538
        %548 = vst.msk [vmem:[%s541 + $0x30] sm:$0xff] %vm311, %v539
        %549 = vst.msk [vmem:[%s541 + $0x38] sm:$0xff] %vm311, %v540
        %v550 = vld [vmem:[#allocation2 + $0x2] sm:$0xff]
        %v551 = vld [vmem:[#allocation2 + $0xa] sm:$0xff]
        %v552 = vld [vmem:[#allocation2 + $0x1a] sm:$0xff]
        %v553 = vld [vmem:[#allocation2 + $0x22] sm:$0xff]
        %v554 = vld [vmem:[#allocation2 + $0x32] sm:$0xff]
        %v555 = vld [vmem:[#allocation2 + $0x3a] sm:$0xff]
        %v556 = vld [vmem:[#allocation2 + $0x4a] sm:$0xff]
        %v557 = vld [vmem:[#allocation2 + $0x52] sm:$0xff]
        %566 = vrot.lane.b32.xlu0 %v550, 127
        %v567 = vpop.permute.xlu0 %566
        %568 = vrot.lane.b32.xlu0 %v551, 127
        %v569 = vpop.permute.xlu0 %568
        %570 = vrot.lane.b32.xlu0 %v552, 127
        %v571 = vpop.permute.xlu0 %570
        %572 = vrot.lane.b32.xlu0 %v553, 127
        %v573 = vpop.permute.xlu0 %572
        %574 = vrot.lane.b32.xlu0 %v554, 127
        %v575 = vpop.permute.xlu0 %574
        %576 = vrot.lane.b32.xlu0 %v555, 127
        %v577 = vpop.permute.xlu0 %576
        %578 = vrot.lane.b32.xlu0 %v556, 127
        %v579 = vpop.permute.xlu0 %578
        %580 = vrot.lane.b32.xlu0 %v557, 127
        %v581 = vpop.permute.xlu0 %580
        %s590 = scalar_lea.vmem [#allocation3], 448
        %591 = vst.msk [vmem:[%s590] sm:$0xff] %vm311, %v567
        %592 = vst.msk [vmem:[%s590 + $0x8] sm:$0xff] %vm311, %v569
        %593 = vst.msk [vmem:[%s590 + $0x10] sm:$0xff] %vm311, %v571
        %594 = vst.msk [vmem:[%s590 + $0x18] sm:$0xff] %vm311, %v573
        %595 = vst.msk [vmem:[%s590 + $0x20] sm:$0xff] %vm311, %v575
        %596 = vst.msk [vmem:[%s590 + $0x28] sm:$0xff] %vm311, %v577
        %597 = vst.msk [vmem:[%s590 + $0x30] sm:$0xff] %vm311, %v579
        %598 = vst.msk [vmem:[%s590 + $0x38] sm:$0xff] %vm311, %v581
        %v599 = vld [vmem:[#allocation2 + $0x2] sm:$0xff]
        %v600 = vld [vmem:[#allocation2 + $0xa] sm:$0xff]
        %v601 = vld [vmem:[#allocation2 + $0x1a] sm:$0xff]
        %v602 = vld [vmem:[#allocation2 + $0x22] sm:$0xff]
        %v603 = vld [vmem:[#allocation2 + $0x32] sm:$0xff]
        %v604 = vld [vmem:[#allocation2 + $0x3a] sm:$0xff]
        %v605 = vld [vmem:[#allocation2 + $0x4a] sm:$0xff]
        %v606 = vld [vmem:[#allocation2 + $0x52] sm:$0xff]
        %615 = vrot.lane.b32.xlu0 %v599, 126
        %v616 = vpop.permute.xlu0 %615
        %617 = vrot.lane.b32.xlu0 %v600, 126
        %v618 = vpop.permute.xlu0 %617
        %619 = vrot.lane.b32.xlu0 %v601, 126
        %v620 = vpop.permute.xlu0 %619
        %621 = vrot.lane.b32.xlu0 %v602, 126
        %v622 = vpop.permute.xlu0 %621
        %623 = vrot.lane.b32.xlu0 %v603, 126
        %v624 = vpop.permute.xlu0 %623
        %625 = vrot.lane.b32.xlu0 %v604, 126
        %v626 = vpop.permute.xlu0 %625
        %627 = vrot.lane.b32.xlu0 %v605, 126
        %v628 = vpop.permute.xlu0 %627
        %629 = vrot.lane.b32.xlu0 %v606, 126
        %v630 = vpop.permute.xlu0 %629
        %s639 = scalar_lea.vmem [#allocation3], 512
        %640 = vst.msk [vmem:[%s639] sm:$0xff] %vm311, %v616
        %641 = vst.msk [vmem:[%s639 + $0x8] sm:$0xff] %vm311, %v618
        %642 = vst.msk [vmem:[%s639 + $0x10] sm:$0xff] %vm311, %v620
        %643 = vst.msk [vmem:[%s639 + $0x18] sm:$0xff] %vm311, %v622
        %644 = vst.msk [vmem:[%s639 + $0x20] sm:$0xff] %vm311, %v624
        %645 = vst.msk [vmem:[%s639 + $0x28] sm:$0xff] %vm311, %v626
        %646 = vst.msk [vmem:[%s639 + $0x30] sm:$0xff] %vm311, %v628
        %647 = vst.msk [vmem:[%s639 + $0x38] sm:$0xff] %vm311, %v630
        %v648 = vld [vmem:[#allocation3] sm:$0xff]
        %v649 = vld [vmem:[#allocation3 + $0x8] sm:$0xff]
        %v650 = vld [vmem:[#allocation3 + $0x10] sm:$0xff]
        %v651 = vld [vmem:[#allocation3 + $0x18] sm:$0xff]
        %v652 = vld [vmem:[#allocation3 + $0x20] sm:$0xff]
        %v653 = vld [vmem:[#allocation3 + $0x28] sm:$0xff]
        %v654 = vld [vmem:[#allocation3 + $0x30] sm:$0xff]
        %v655 = vld [vmem:[#allocation3 + $0x38] sm:$0xff]
        %v656 = vld [vmem:[#allocation3 + $0x40] sm:$0xff]
        %v657 = vld [vmem:[#allocation3 + $0x48] sm:$0xff]
        %v658 = vld [vmem:[#allocation3 + $0x50] sm:$0xff]
        %v659 = vld [vmem:[#allocation3 + $0x58] sm:$0xff]
        %v660 = vld [vmem:[#allocation3 + $0x60] sm:$0xff]
        %v661 = vld [vmem:[#allocation3 + $0x68] sm:$0xff]
        %v662 = vld [vmem:[#allocation3 + $0x70] sm:$0xff]
        %v663 = vld [vmem:[#allocation3 + $0x78] sm:$0xff]
        %v664 = vld [vmem:[#allocation3 + $0x80] sm:$0xff]
        %v665 = vld [vmem:[#allocation3 + $0x88] sm:$0xff]
        %v666 = vld [vmem:[#allocation3 + $0x90] sm:$0xff]
        %v667 = vld [vmem:[#allocation3 + $0x98] sm:$0xff]
        %v668 = vld [vmem:[#allocation3 + $0xa0] sm:$0xff]
        %v669 = vld [vmem:[#allocation3 + $0xa8] sm:$0xff]
        %v670 = vld [vmem:[#allocation3 + $0xb0] sm:$0xff]
        %v671 = vld [vmem:[#allocation3 + $0xb8] sm:$0xff]
        %v672 = vld [vmem:[#allocation3 + $0xc0] sm:$0xff]
        %v673 = vld [vmem:[#allocation3 + $0xc8] sm:$0xff]
        %v674 = vld [vmem:[#allocation3 + $0xd0] sm:$0xff]
        %v675 = vld [vmem:[#allocation3 + $0xd8] sm:$0xff]
        %v676 = vld [vmem:[#allocation3 + $0xe0] sm:$0xff]
        %v677 = vld [vmem:[#allocation3 + $0xe8] sm:$0xff]
        %v678 = vld [vmem:[#allocation3 + $0xf0] sm:$0xff]
        %v679 = vld [vmem:[#allocation3 + $0xf8] sm:$0xff]
        %v680 = vld [vmem:[#allocation3 + $0x100] sm:$0xff]
        %v681 = vld [vmem:[#allocation3 + $0x108] sm:$0xff]
        %v682 = vld [vmem:[#allocation3 + $0x110] sm:$0xff]
        %v683 = vld [vmem:[#allocation3 + $0x118] sm:$0xff]
        %v684 = vld [vmem:[#allocation3 + $0x120] sm:$0xff]
        %v685 = vld [vmem:[#allocation3 + $0x128] sm:$0xff]
        %v686 = vld [vmem:[#allocation3 + $0x130] sm:$0xff]
        %v687 = vld [vmem:[#allocation3 + $0x138] sm:$0xff]
        %v688 = vld [vmem:[#allocation3 + $0x140] sm:$0xff]
        %v689 = vld [vmem:[#allocation3 + $0x148] sm:$0xff]
        %v690 = vld [vmem:[#allocation3 + $0x150] sm:$0xff]
        %v691 = vld [vmem:[#allocation3 + $0x158] sm:$0xff]
        %v692 = vld [vmem:[#allocation3 + $0x160] sm:$0xff]
        %v693 = vld [vmem:[#allocation3 + $0x168] sm:$0xff]
        %v694 = vld [vmem:[#allocation3 + $0x170] sm:$0xff]
        %v695 = vld [vmem:[#allocation3 + $0x178] sm:$0xff]
        %v696 = vld [vmem:[#allocation3 + $0x180] sm:$0xff]
        %v697 = vld [vmem:[#allocation3 + $0x188] sm:$0xff]
        %v698 = vld [vmem:[#allocation3 + $0x190] sm:$0xff]
        %v699 = vld [vmem:[#allocation3 + $0x198] sm:$0xff]
        %v700 = vld [vmem:[#allocation3 + $0x1a0] sm:$0xff]
        %v701 = vld [vmem:[#allocation3 + $0x1a8] sm:$0xff]
        %v702 = vld [vmem:[#allocation3 + $0x1b0] sm:$0xff]
        %v703 = vld [vmem:[#allocation3 + $0x1b8] sm:$0xff]
        %v704 = vld [vmem:[#allocation3 + $0x1c0] sm:$0xff]
        %v705 = vld [vmem:[#allocation3 + $0x1c8] sm:$0xff]
        %v706 = vld [vmem:[#allocation3 + $0x1d0] sm:$0xff]
        %v707 = vld [vmem:[#allocation3 + $0x1d8] sm:$0xff]
        %v708 = vld [vmem:[#allocation3 + $0x1e0] sm:$0xff]
        %v709 = vld [vmem:[#allocation3 + $0x1e8] sm:$0xff]
        %v710 = vld [vmem:[#allocation3 + $0x1f0] sm:$0xff]
        %v711 = vld [vmem:[#allocation3 + $0x1f8] sm:$0xff]
        %v712 = vld [vmem:[#allocation3 + $0x200] sm:$0xff]
        %v713 = vld [vmem:[#allocation3 + $0x208] sm:$0xff]
        %v714 = vld [vmem:[#allocation3 + $0x210] sm:$0xff]
        %v715 = vld [vmem:[#allocation3 + $0x218] sm:$0xff]
        %v716 = vld [vmem:[#allocation3 + $0x220] sm:$0xff]
        %v717 = vld [vmem:[#allocation3 + $0x228] sm:$0xff]
        %v718 = vld [vmem:[#allocation3 + $0x230] sm:$0xff]
        %v719 = vld [vmem:[#allocation3 + $0x238] sm:$0xff]
        %v720 = vcombine.low %v648, %v652
        %v721 = vcombine.high %v648, %v652
        %v723 = vunpack.c.l.s4 1983009808
        %v724 = vunpack.c.0.s8 %v723
        %v725 = vlaneseq
        %v726 = vshrl.u32 %v725, 7
        %v727 = vsub.s32 %v724, %v726
        %v728 = vrot.slane %v720, %v727
        %v730 = vunpack.c.l.s4 1983009808
        %v731 = vunpack.c.0.s8 %v730
        %v732 = vlaneseq
        %v733 = vshrl.u32 %v732, 7
        %v734 = vsub.s32 %v731, %v733
        %v735 = vrot.slane %v721, %v734
        %v736 = vcombine.low %v650, %v654
        %v737 = vcombine.high %v650, %v654
        %v739 = vunpack.c.l.s4 1983009808
        %v740 = vunpack.c.0.s8 %v739
        %v741 = vlaneseq
        %v742 = vshrl.u32 %v741, 7
        %v743 = vsub.s32 %v740, %v742
        %v744 = vrot.slane %v736, %v743
        %v746 = vunpack.c.l.s4 1983009808
        %v747 = vunpack.c.0.s8 %v746
        %v748 = vlaneseq
        %v749 = vshrl.u32 %v748, 7
        %v750 = vsub.s32 %v747, %v749
        %v751 = vrot.slane %v737, %v750
        %v752 = vcombine.low %v656, %v660
        %v753 = vcombine.high %v656, %v660
        %v755 = vunpack.c.l.s4 1983009808
        %v756 = vunpack.c.0.s8 %v755
        %v757 = vlaneseq
        %v758 = vshrl.u32 %v757, 7
        %v759 = vsub.s32 %v756, %v758
        %v760 = vrot.slane %v752, %v759
        %v762 = vunpack.c.l.s4 1983009808
        %v763 = vunpack.c.0.s8 %v762
        %v764 = vlaneseq
        %v765 = vshrl.u32 %v764, 7
        %v766 = vsub.s32 %v763, %v765
        %v767 = vrot.slane %v753, %v766
        %v768 = vcombine.low %v658, %v662
        %v769 = vcombine.high %v658, %v662
        %v771 = vunpack.c.l.s4 1983009808
        %v772 = vunpack.c.0.s8 %v771
        %v773 = vlaneseq
        %v774 = vshrl.u32 %v773, 7
        %v775 = vsub.s32 %v772, %v774
        %v776 = vrot.slane %v768, %v775
        %v778 = vunpack.c.l.s4 1983009808
        %v779 = vunpack.c.0.s8 %v778
        %v780 = vlaneseq
        %v781 = vshrl.u32 %v780, 7
        %v782 = vsub.s32 %v779, %v781
        %v783 = vrot.slane %v769, %v782
        %v784 = vcombine.low %v728, %v744
        %v785 = vcombine.high %v728, %v744
        %v787 = vunpack.c.l.s4 1934713408
        %v788 = vunpack.c.0.s8 %v787
        %v789 = vlaneseq
        %v790 = vshrl.u32 %v789, 7
        %v791 = vsub.s32 %v788, %v790
        %v792 = vrot.slane %v784, %v791
        %v794 = vunpack.c.l.s4 1934713408
        %v795 = vunpack.c.0.s8 %v794
        %v796 = vlaneseq
        %v797 = vshrl.u32 %v796, 7
        %v798 = vsub.s32 %v795, %v797
        %v799 = vrot.slane %v785, %v798
        %v800 = vcombine.low %v735, %v751
        %v801 = vcombine.high %v735, %v751
        %v803 = vunpack.c.l.s4 1934713408
        %v804 = vunpack.c.0.s8 %v803
        %v805 = vlaneseq
        %v806 = vshrl.u32 %v805, 7
        %v807 = vsub.s32 %v804, %v806
        %v808 = vrot.slane %v800, %v807
        %v810 = vunpack.c.l.s4 1934713408
        %v811 = vunpack.c.0.s8 %v810
        %v812 = vlaneseq
        %v813 = vshrl.u32 %v812, 7
        %v814 = vsub.s32 %v811, %v813
        %v815 = vrot.slane %v801, %v814
        %v816 = vcombine.low %v760, %v776
        %v817 = vcombine.high %v760, %v776
        %v819 = vunpack.c.l.s4 1934713408
        %v820 = vunpack.c.0.s8 %v819
        %v821 = vlaneseq
        %v822 = vshrl.u32 %v821, 7
        %v823 = vsub.s32 %v820, %v822
        %v824 = vrot.slane %v816, %v823
        %v826 = vunpack.c.l.s4 1934713408
        %v827 = vunpack.c.0.s8 %v826
        %v828 = vlaneseq
        %v829 = vshrl.u32 %v828, 7
        %v830 = vsub.s32 %v827, %v829
        %v831 = vrot.slane %v817, %v830
        %v832 = vcombine.low %v767, %v783
        %v833 = vcombine.high %v767, %v783
        %v835 = vunpack.c.l.s4 1934713408
        %v836 = vunpack.c.0.s8 %v835
        %v837 = vlaneseq
        %v838 = vshrl.u32 %v837, 7
        %v839 = vsub.s32 %v836, %v838
        %v840 = vrot.slane %v832, %v839
        %v842 = vunpack.c.l.s4 1934713408
        %v843 = vunpack.c.0.s8 %v842
        %v844 = vlaneseq
        %v845 = vshrl.u32 %v844, 7
        %v846 = vsub.s32 %v843, %v845
        %v847 = vrot.slane %v833, %v846
        %v848 = vcombine.low %v792, %v824
        %v849 = vcombine.high %v792, %v824
        %v850 = vcombine.low %v799, %v831
        %v851 = vcombine.high %v799, %v831
        %v852 = vcombine.low %v808, %v840
        %v853 = vcombine.high %v808, %v840
        %v854 = vcombine.low %v815, %v847
        %v855 = vcombine.high %v815, %v847
        %v856 = vcombine.low %v664, %v668
        %v857 = vcombine.high %v664, %v668
        %v859 = vunpack.c.l.s4 1983009808
        %v860 = vunpack.c.0.s8 %v859
        %v861 = vlaneseq
        %v862 = vshrl.u32 %v861, 7
        %v863 = vsub.s32 %v860, %v862
        %v864 = vrot.slane %v856, %v863
        %v866 = vunpack.c.l.s4 1983009808
        %v867 = vunpack.c.0.s8 %v866
        %v868 = vlaneseq
        %v869 = vshrl.u32 %v868, 7
        %v870 = vsub.s32 %v867, %v869
        %v871 = vrot.slane %v857, %v870
        %v872 = vcombine.low %v666, %v670
        %v873 = vcombine.high %v666, %v670
        %v875 = vunpack.c.l.s4 1983009808
        %v876 = vunpack.c.0.s8 %v875
        %v877 = vlaneseq
        %v878 = vshrl.u32 %v877, 7
        %v879 = vsub.s32 %v876, %v878
        %v880 = vrot.slane %v872, %v879
        %v882 = vunpack.c.l.s4 1983009808
        %v883 = vunpack.c.0.s8 %v882
        %v884 = vlaneseq
        %v885 = vshrl.u32 %v884, 7
        %v886 = vsub.s32 %v883, %v885
        %v887 = vrot.slane %v873, %v886
        %v888 = vcombine.low %v672, %v676
        %v889 = vcombine.high %v672, %v676
        %v891 = vunpack.c.l.s4 1983009808
        %v892 = vunpack.c.0.s8 %v891
        %v893 = vlaneseq
        %v894 = vshrl.u32 %v893, 7
        %v895 = vsub.s32 %v892, %v894
        %v896 = vrot.slane %v888, %v895
        %v898 = vunpack.c.l.s4 1983009808
        %v899 = vunpack.c.0.s8 %v898
        %v900 = vlaneseq
        %v901 = vshrl.u32 %v900, 7
        %v902 = vsub.s32 %v899, %v901
        %v903 = vrot.slane %v889, %v902
        %v904 = vcombine.low %v674, %v678
        %v905 = vcombine.high %v674, %v678
        %v907 = vunpack.c.l.s4 1983009808
        %v908 = vunpack.c.0.s8 %v907
        %v909 = vlaneseq
        %v910 = vshrl.u32 %v909, 7
        %v911 = vsub.s32 %v908, %v910
        %v912 = vrot.slane %v904, %v911
        %v914 = vunpack.c.l.s4 1983009808
        %v915 = vunpack.c.0.s8 %v914
        %v916 = vlaneseq
        %v917 = vshrl.u32 %v916, 7
        %v918 = vsub.s32 %v915, %v917
        %v919 = vrot.slane %v905, %v918
        %v920 = vcombine.low %v864, %v880
        %v921 = vcombine.high %v864, %v880
        %v923 = vunpack.c.l.s4 1934713408
        %v924 = vunpack.c.0.s8 %v923
        %v925 = vlaneseq
        %v926 = vshrl.u32 %v925, 7
        %v927 = vsub.s32 %v924, %v926
        %v928 = vrot.slane %v920, %v927
        %v930 = vunpack.c.l.s4 1934713408
        %v931 = vunpack.c.0.s8 %v930
        %v932 = vlaneseq
        %v933 = vshrl.u32 %v932, 7
        %v934 = vsub.s32 %v931, %v933
        %v935 = vrot.slane %v921, %v934
        %v936 = vcombine.low %v871, %v887
        %v937 = vcombine.high %v871, %v887
        %v939 = vunpack.c.l.s4 1934713408
        %v940 = vunpack.c.0.s8 %v939
        %v941 = vlaneseq
        %v942 = vshrl.u32 %v941, 7
        %v943 = vsub.s32 %v940, %v942
        %v944 = vrot.slane %v936, %v943
        %v946 = vunpack.c.l.s4 1934713408
        %v947 = vunpack.c.0.s8 %v946
        %v948 = vlaneseq
        %v949 = vshrl.u32 %v948, 7
        %v950 = vsub.s32 %v947, %v949
        %v951 = vrot.slane %v937, %v950
        %v952 = vcombine.low %v896, %v912
        %v953 = vcombine.high %v896, %v912
        %v955 = vunpack.c.l.s4 1934713408
        %v956 = vunpack.c.0.s8 %v955
        %v957 = vlaneseq
        %v958 = vshrl.u32 %v957, 7
        %v959 = vsub.s32 %v956, %v958
        %v960 = vrot.slane %v952, %v959
        %v962 = vunpack.c.l.s4 1934713408
        %v963 = vunpack.c.0.s8 %v962
        %v964 = vlaneseq
        %v965 = vshrl.u32 %v964, 7
        %v966 = vsub.s32 %v963, %v965
        %v967 = vrot.slane %v953, %v966
        %v968 = vcombine.low %v903, %v919
        %v969 = vcombine.high %v903, %v919
        %v971 = vunpack.c.l.s4 1934713408
        %v972 = vunpack.c.0.s8 %v971
        %v973 = vlaneseq
        %v974 = vshrl.u32 %v973, 7
        %v975 = vsub.s32 %v972, %v974
        %v976 = vrot.slane %v968, %v975
        %v978 = vunpack.c.l.s4 1934713408
        %v979 = vunpack.c.0.s8 %v978
        %v980 = vlaneseq
        %v981 = vshrl.u32 %v980, 7
        %v982 = vsub.s32 %v979, %v981
        %v983 = vrot.slane %v969, %v982
        %v984 = vcombine.low %v928, %v960
        %v985 = vcombine.high %v928, %v960
        %v986 = vcombine.low %v935, %v967
        %v987 = vcombine.high %v935, %v967
        %v988 = vcombine.low %v944, %v976
        %v989 = vcombine.high %v944, %v976
        %v990 = vcombine.low %v951, %v983
        %v991 = vcombine.high %v951, %v983
        %v992 = vcombine.low %v680, %v684
        %v993 = vcombine.high %v680, %v684
        %v995 = vunpack.c.l.s4 1983009808
        %v996 = vunpack.c.0.s8 %v995
        %v997 = vlaneseq
        %v998 = vshrl.u32 %v997, 7
        %v999 = vsub.s32 %v996, %v998
        %v1000 = vrot.slane %v992, %v999
        %v1002 = vunpack.c.l.s4 1983009808
        %v1003 = vunpack.c.0.s8 %v1002
        %v1004 = vlaneseq
        %v1005 = vshrl.u32 %v1004, 7
        %v1006 = vsub.s32 %v1003, %v1005
        %v1007 = vrot.slane %v993, %v1006
        %v1008 = vcombine.low %v682, %v686
        %v1009 = vcombine.high %v682, %v686
        %v1011 = vunpack.c.l.s4 1983009808
        %v1012 = vunpack.c.0.s8 %v1011
        %v1013 = vlaneseq
        %v1014 = vshrl.u32 %v1013, 7
        %v1015 = vsub.s32 %v1012, %v1014
        %v1016 = vrot.slane %v1008, %v1015
        %v1018 = vunpack.c.l.s4 1983009808
        %v1019 = vunpack.c.0.s8 %v1018
        %v1020 = vlaneseq
        %v1021 = vshrl.u32 %v1020, 7
        %v1022 = vsub.s32 %v1019, %v1021
        %v1023 = vrot.slane %v1009, %v1022
        %v1024 = vcombine.low %v688, %v692
        %v1025 = vcombine.high %v688, %v692
        %v1027 = vunpack.c.l.s4 1983009808
        %v1028 = vunpack.c.0.s8 %v1027
        %v1029 = vlaneseq
        %v1030 = vshrl.u32 %v1029, 7
        %v1031 = vsub.s32 %v1028, %v1030
        %v1032 = vrot.slane %v1024, %v1031
        %v1034 = vunpack.c.l.s4 1983009808
        %v1035 = vunpack.c.0.s8 %v1034
        %v1036 = vlaneseq
        %v1037 = vshrl.u32 %v1036, 7
        %v1038 = vsub.s32 %v1035, %v1037
        %v1039 = vrot.slane %v1025, %v1038
        %v1040 = vcombine.low %v690, %v694
        %v1041 = vcombine.high %v690, %v694
        %v1043 = vunpack.c.l.s4 1983009808
        %v1044 = vunpack.c.0.s8 %v1043
        %v1045 = vlaneseq
        %v1046 = vshrl.u32 %v1045, 7
        %v1047 = vsub.s32 %v1044, %v1046
        %v1048 = vrot.slane %v1040, %v1047
        %v1050 = vunpack.c.l.s4 1983009808
        %v1051 = vunpack.c.0.s8 %v1050
        %v1052 = vlaneseq
        %v1053 = vshrl.u32 %v1052, 7
        %v1054 = vsub.s32 %v1051, %v1053
        %v1055 = vrot.slane %v1041, %v1054
        %v1056 = vcombine.low %v1000, %v1016
        %v1057 = vcombine.high %v1000, %v1016
        %v1059 = vunpack.c.l.s4 1934713408
        %v1060 = vunpack.c.0.s8 %v1059
        %v1061 = vlaneseq
        %v1062 = vshrl.u32 %v1061, 7
        %v1063 = vsub.s32 %v1060, %v1062
        %v1064 = vrot.slane %v1056, %v1063
        %v1066 = vunpack.c.l.s4 1934713408
        %v1067 = vunpack.c.0.s8 %v1066
        %v1068 = vlaneseq
        %v1069 = vshrl.u32 %v1068, 7
        %v1070 = vsub.s32 %v1067, %v1069
        %v1071 = vrot.slane %v1057, %v1070
        %v1072 = vcombine.low %v1007, %v1023
        %v1073 = vcombine.high %v1007, %v1023
        %v1075 = vunpack.c.l.s4 1934713408
        %v1076 = vunpack.c.0.s8 %v1075
        %v1077 = vlaneseq
        %v1078 = vshrl.u32 %v1077, 7
        %v1079 = vsub.s32 %v1076, %v1078
        %v1080 = vrot.slane %v1072, %v1079
        %v1082 = vunpack.c.l.s4 1934713408
        %v1083 = vunpack.c.0.s8 %v1082
        %v1084 = vlaneseq
        %v1085 = vshrl.u32 %v1084, 7
        %v1086 = vsub.s32 %v1083, %v1085
        %v1087 = vrot.slane %v1073, %v1086
        %v1088 = vcombine.low %v1032, %v1048
        %v1089 = vcombine.high %v1032, %v1048
        %v1091 = vunpack.c.l.s4 1934713408
        %v1092 = vunpack.c.0.s8 %v1091
        %v1093 = vlaneseq
        %v1094 = vshrl.u32 %v1093, 7
        %v1095 = vsub.s32 %v1092, %v1094
        %v1096 = vrot.slane %v1088, %v1095
        %v1098 = vunpack.c.l.s4 1934713408
        %v1099 = vunpack.c.0.s8 %v1098
        %v1100 = vlaneseq
        %v1101 = vshrl.u32 %v1100, 7
        %v1102 = vsub.s32 %v1099, %v1101
        %v1103 = vrot.slane %v1089, %v1102
        %v1104 = vcombine.low %v1039, %v1055
        %v1105 = vcombine.high %v1039, %v1055
        %v1107 = vunpack.c.l.s4 1934713408
        %v1108 = vunpack.c.0.s8 %v1107
        %v1109 = vlaneseq
        %v1110 = vshrl.u32 %v1109, 7
        %v1111 = vsub.s32 %v1108, %v1110
        %v1112 = vrot.slane %v1104, %v1111
        %v1114 = vunpack.c.l.s4 1934713408
        %v1115 = vunpack.c.0.s8 %v1114
        %v1116 = vlaneseq
        %v1117 = vshrl.u32 %v1116, 7
        %v1118 = vsub.s32 %v1115, %v1117
        %v1119 = vrot.slane %v1105, %v1118
        %v1120 = vcombine.low %v1064, %v1096
        %v1121 = vcombine.high %v1064, %v1096
        %v1122 = vcombine.low %v1071, %v1103
        %v1123 = vcombine.high %v1071, %v1103
        %v1124 = vcombine.low %v1080, %v1112
        %v1125 = vcombine.high %v1080, %v1112
        %v1126 = vcombine.low %v1087, %v1119
        %v1127 = vcombine.high %v1087, %v1119
        %v1128 = vcombine.low %v696, %v700
        %v1129 = vcombine.high %v696, %v700
        %v1131 = vunpack.c.l.s4 1983009808
        %v1132 = vunpack.c.0.s8 %v1131
        %v1133 = vlaneseq
        %v1134 = vshrl.u32 %v1133, 7
        %v1135 = vsub.s32 %v1132, %v1134
        %v1136 = vrot.slane %v1128, %v1135
        %v1138 = vunpack.c.l.s4 1983009808
        %v1139 = vunpack.c.0.s8 %v1138
        %v1140 = vlaneseq
        %v1141 = vshrl.u32 %v1140, 7
        %v1142 = vsub.s32 %v1139, %v1141
        %v1143 = vrot.slane %v1129, %v1142
        %v1144 = vcombine.low %v698, %v702
        %v1145 = vcombine.high %v698, %v702
        %v1147 = vunpack.c.l.s4 1983009808
        %v1148 = vunpack.c.0.s8 %v1147
        %v1149 = vlaneseq
        %v1150 = vshrl.u32 %v1149, 7
        %v1151 = vsub.s32 %v1148, %v1150
        %v1152 = vrot.slane %v1144, %v1151
        %v1154 = vunpack.c.l.s4 1983009808
        %v1155 = vunpack.c.0.s8 %v1154
        %v1156 = vlaneseq
        %v1157 = vshrl.u32 %v1156, 7
        %v1158 = vsub.s32 %v1155, %v1157
        %v1159 = vrot.slane %v1145, %v1158
        %v1160 = vcombine.low %v704, %v708
        %v1161 = vcombine.high %v704, %v708
        %v1163 = vunpack.c.l.s4 1983009808
        %v1164 = vunpack.c.0.s8 %v1163
        %v1165 = vlaneseq
        %v1166 = vshrl.u32 %v1165, 7
        %v1167 = vsub.s32 %v1164, %v1166
        %v1168 = vrot.slane %v1160, %v1167
        %v1170 = vunpack.c.l.s4 1983009808
        %v1171 = vunpack.c.0.s8 %v1170
        %v1172 = vlaneseq
        %v1173 = vshrl.u32 %v1172, 7
        %v1174 = vsub.s32 %v1171, %v1173
        %v1175 = vrot.slane %v1161, %v1174
        %v1176 = vcombine.low %v706, %v710
        %v1177 = vcombine.high %v706, %v710
        %v1179 = vunpack.c.l.s4 1983009808
        %v1180 = vunpack.c.0.s8 %v1179
        %v1181 = vlaneseq
        %v1182 = vshrl.u32 %v1181, 7
        %v1183 = vsub.s32 %v1180, %v1182
        %v1184 = vrot.slane %v1176, %v1183
        %v1186 = vunpack.c.l.s4 1983009808
        %v1187 = vunpack.c.0.s8 %v1186
        %v1188 = vlaneseq
        %v1189 = vshrl.u32 %v1188, 7
        %v1190 = vsub.s32 %v1187, %v1189
        %v1191 = vrot.slane %v1177, %v1190
        %v1192 = vcombine.low %v1136, %v1152
        %v1193 = vcombine.high %v1136, %v1152
        %v1195 = vunpack.c.l.s4 1934713408
        %v1196 = vunpack.c.0.s8 %v1195
        %v1197 = vlaneseq
        %v1198 = vshrl.u32 %v1197, 7
        %v1199 = vsub.s32 %v1196, %v1198
        %v1200 = vrot.slane %v1192, %v1199
        %v1202 = vunpack.c.l.s4 1934713408
        %v1203 = vunpack.c.0.s8 %v1202
        %v1204 = vlaneseq
        %v1205 = vshrl.u32 %v1204, 7
        %v1206 = vsub.s32 %v1203, %v1205
        %v1207 = vrot.slane %v1193, %v1206
        %v1208 = vcombine.low %v1143, %v1159
        %v1209 = vcombine.high %v1143, %v1159
        %v1211 = vunpack.c.l.s4 1934713408
        %v1212 = vunpack.c.0.s8 %v1211
        %v1213 = vlaneseq
        %v1214 = vshrl.u32 %v1213, 7
        %v1215 = vsub.s32 %v1212, %v1214
        %v1216 = vrot.slane %v1208, %v1215
        %v1218 = vunpack.c.l.s4 1934713408
        %v1219 = vunpack.c.0.s8 %v1218
        %v1220 = vlaneseq
        %v1221 = vshrl.u32 %v1220, 7
        %v1222 = vsub.s32 %v1219, %v1221
        %v1223 = vrot.slane %v1209, %v1222
        %v1224 = vcombine.low %v1168, %v1184
        %v1225 = vcombine.high %v1168, %v1184
        %v1227 = vunpack.c.l.s4 1934713408
        %v1228 = vunpack.c.0.s8 %v1227
        %v1229 = vlaneseq
        %v1230 = vshrl.u32 %v1229, 7
        %v1231 = vsub.s32 %v1228, %v1230
        %v1232 = vrot.slane %v1224, %v1231
        %v1234 = vunpack.c.l.s4 1934713408
        %v1235 = vunpack.c.0.s8 %v1234
        %v1236 = vlaneseq
        %v1237 = vshrl.u32 %v1236, 7
        %v1238 = vsub.s32 %v1235, %v1237
        %v1239 = vrot.slane %v1225, %v1238
        %v1240 = vcombine.low %v1175, %v1191
        %v1241 = vcombine.high %v1175, %v1191
        %v1243 = vunpack.c.l.s4 1934713408
        %v1244 = vunpack.c.0.s8 %v1243
        %v1245 = vlaneseq
        %v1246 = vshrl.u32 %v1245, 7
        %v1247 = vsub.s32 %v1244, %v1246
        %v1248 = vrot.slane %v1240, %v1247
        %v1250 = vunpack.c.l.s4 1934713408
        %v1251 = vunpack.c.0.s8 %v1250
        %v1252 = vlaneseq
        %v1253 = vshrl.u32 %v1252, 7
        %v1254 = vsub.s32 %v1251, %v1253
        %v1255 = vrot.slane %v1241, %v1254
        %v1256 = vcombine.low %v1200, %v1232
        %v1257 = vcombine.high %v1200, %v1232
        %v1258 = vcombine.low %v1207, %v1239
        %v1259 = vcombine.high %v1207, %v1239
        %v1260 = vcombine.low %v1216, %v1248
        %v1261 = vcombine.high %v1216, %v1248
        %v1262 = vcombine.low %v1223, %v1255
        %v1263 = vcombine.high %v1223, %v1255
        %v1264 = vcombine.low %v712, %v716
        %v1265 = vcombine.high %v712, %v716
        %v1267 = vunpack.c.l.s4 1983009808
        %v1268 = vunpack.c.0.s8 %v1267
        %v1269 = vlaneseq
        %v1270 = vshrl.u32 %v1269, 7
        %v1271 = vsub.s32 %v1268, %v1270
        %v1272 = vrot.slane %v1264, %v1271
        %v1274 = vunpack.c.l.s4 1983009808
        %v1275 = vunpack.c.0.s8 %v1274
        %v1276 = vlaneseq
        %v1277 = vshrl.u32 %v1276, 7
        %v1278 = vsub.s32 %v1275, %v1277
        %v1279 = vrot.slane %v1265, %v1278
        %v1280 = vcombine.low %v714, %v718
        %v1281 = vcombine.high %v714, %v718
        %v1283 = vunpack.c.l.s4 1983009808
        %v1284 = vunpack.c.0.s8 %v1283
        %v1285 = vlaneseq
        %v1286 = vshrl.u32 %v1285, 7
        %v1287 = vsub.s32 %v1284, %v1286
        %v1288 = vrot.slane %v1280, %v1287
        %v1290 = vunpack.c.l.s4 1983009808
        %v1291 = vunpack.c.0.s8 %v1290
        %v1292 = vlaneseq
        %v1293 = vshrl.u32 %v1292, 7
        %v1294 = vsub.s32 %v1291, %v1293
        %v1295 = vrot.slane %v1281, %v1294
        %v1296 = vcombine.low %v1272, %v1288
        %v1297 = vcombine.high %v1272, %v1288
        %v1299 = vunpack.c.l.s4 1934713408
        %v1300 = vunpack.c.0.s8 %v1299
        %v1301 = vlaneseq
        %v1302 = vshrl.u32 %v1301, 7
        %v1303 = vsub.s32 %v1300, %v1302
        %v1304 = vrot.slane %v1296, %v1303
        %v1306 = vunpack.c.l.s4 1934713408
        %v1307 = vunpack.c.0.s8 %v1306
        %v1308 = vlaneseq
        %v1309 = vshrl.u32 %v1308, 7
        %v1310 = vsub.s32 %v1307, %v1309
        %v1311 = vrot.slane %v1297, %v1310
        %v1312 = vcombine.low %v1279, %v1295
        %v1313 = vcombine.high %v1279, %v1295
        %v1315 = vunpack.c.l.s4 1934713408
        %v1316 = vunpack.c.0.s8 %v1315
        %v1317 = vlaneseq
        %v1318 = vshrl.u32 %v1317, 7
        %v1319 = vsub.s32 %v1316, %v1318
        %v1320 = vrot.slane %v1312, %v1319
        %v1322 = vunpack.c.l.s4 1934713408
        %v1323 = vunpack.c.0.s8 %v1322
        %v1324 = vlaneseq
        %v1325 = vshrl.u32 %v1324, 7
        %v1326 = vsub.s32 %v1323, %v1325
        %v1327 = vrot.slane %v1313, %v1326
        %v1328 = vcombine.high %v1304, 0.0
        %v1329 = vcombine.high %v1311, 0.0
        %v1330 = vcombine.high %v1320, 0.0
        %v1331 = vcombine.high %v1327, 0.0
        %v1332 = vcombine.low %v649, %v653
        %v1333 = vcombine.high %v649, %v653
        %v1335 = vunpack.c.l.s4 1983009808
        %v1336 = vunpack.c.0.s8 %v1335
        %v1337 = vlaneseq
        %v1338 = vshrl.u32 %v1337, 7
        %v1339 = vsub.s32 %v1336, %v1338
        %v1340 = vrot.slane %v1332, %v1339
        %v1342 = vunpack.c.l.s4 1983009808
        %v1343 = vunpack.c.0.s8 %v1342
        %v1344 = vlaneseq
        %v1345 = vshrl.u32 %v1344, 7
        %v1346 = vsub.s32 %v1343, %v1345
        %v1347 = vrot.slane %v1333, %v1346
        %v1348 = vcombine.low %v651, %v655
        %v1349 = vcombine.high %v651, %v655
        %v1351 = vunpack.c.l.s4 1983009808
        %v1352 = vunpack.c.0.s8 %v1351
        %v1353 = vlaneseq
        %v1354 = vshrl.u32 %v1353, 7
        %v1355 = vsub.s32 %v1352, %v1354
        %v1356 = vrot.slane %v1348, %v1355
        %v1358 = vunpack.c.l.s4 1983009808
        %v1359 = vunpack.c.0.s8 %v1358
        %v1360 = vlaneseq
        %v1361 = vshrl.u32 %v1360, 7
        %v1362 = vsub.s32 %v1359, %v1361
        %v1363 = vrot.slane %v1349, %v1362
        %v1364 = vcombine.low %v657, %v661
        %v1365 = vcombine.high %v657, %v661
        %v1367 = vunpack.c.l.s4 1983009808
        %v1368 = vunpack.c.0.s8 %v1367
        %v1369 = vlaneseq
        %v1370 = vshrl.u32 %v1369, 7
        %v1371 = vsub.s32 %v1368, %v1370
        %v1372 = vrot.slane %v1364, %v1371
        %v1374 = vunpack.c.l.s4 1983009808
        %v1375 = vunpack.c.0.s8 %v1374
        %v1376 = vlaneseq
        %v1377 = vshrl.u32 %v1376, 7
        %v1378 = vsub.s32 %v1375, %v1377
        %v1379 = vrot.slane %v1365, %v1378
        %v1380 = vcombine.low %v659, %v663
        %v1381 = vcombine.high %v659, %v663
        %v1383 = vunpack.c.l.s4 1983009808
        %v1384 = vunpack.c.0.s8 %v1383
        %v1385 = vlaneseq
        %v1386 = vshrl.u32 %v1385, 7
        %v1387 = vsub.s32 %v1384, %v1386
        %v1388 = vrot.slane %v1380, %v1387
        %v1390 = vunpack.c.l.s4 1983009808
        %v1391 = vunpack.c.0.s8 %v1390
        %v1392 = vlaneseq
        %v1393 = vshrl.u32 %v1392, 7
        %v1394 = vsub.s32 %v1391, %v1393
        %v1395 = vrot.slane %v1381, %v1394
        %v1396 = vcombine.low %v1340, %v1356
        %v1397 = vcombine.high %v1340, %v1356
        %v1399 = vunpack.c.l.s4 1934713408
        %v1400 = vunpack.c.0.s8 %v1399
        %v1401 = vlaneseq
        %v1402 = vshrl.u32 %v1401, 7
        %v1403 = vsub.s32 %v1400, %v1402
        %v1404 = vrot.slane %v1396, %v1403
        %v1406 = vunpack.c.l.s4 1934713408
        %v1407 = vunpack.c.0.s8 %v1406
        %v1408 = vlaneseq
        %v1409 = vshrl.u32 %v1408, 7
        %v1410 = vsub.s32 %v1407, %v1409
        %v1411 = vrot.slane %v1397, %v1410
        %v1412 = vcombine.low %v1347, %v1363
        %v1413 = vcombine.high %v1347, %v1363
        %v1415 = vunpack.c.l.s4 1934713408
        %v1416 = vunpack.c.0.s8 %v1415
        %v1417 = vlaneseq
        %v1418 = vshrl.u32 %v1417, 7
        %v1419 = vsub.s32 %v1416, %v1418
        %v1420 = vrot.slane %v1412, %v1419
        %v1422 = vunpack.c.l.s4 1934713408
        %v1423 = vunpack.c.0.s8 %v1422
        %v1424 = vlaneseq
        %v1425 = vshrl.u32 %v1424, 7
        %v1426 = vsub.s32 %v1423, %v1425
        %v1427 = vrot.slane %v1413, %v1426
        %v1428 = vcombine.low %v1372, %v1388
        %v1429 = vcombine.high %v1372, %v1388
        %v1431 = vunpack.c.l.s4 1934713408
        %v1432 = vunpack.c.0.s8 %v1431
        %v1433 = vlaneseq
        %v1434 = vshrl.u32 %v1433, 7
        %v1435 = vsub.s32 %v1432, %v1434
        %v1436 = vrot.slane %v1428, %v1435
        %v1438 = vunpack.c.l.s4 1934713408
        %v1439 = vunpack.c.0.s8 %v1438
        %v1440 = vlaneseq
        %v1441 = vshrl.u32 %v1440, 7
        %v1442 = vsub.s32 %v1439, %v1441
        %v1443 = vrot.slane %v1429, %v1442
        %v1444 = vcombine.low %v1379, %v1395
        %v1445 = vcombine.high %v1379, %v1395
        %v1447 = vunpack.c.l.s4 1934713408
        %v1448 = vunpack.c.0.s8 %v1447
        %v1449 = vlaneseq
        %v1450 = vshrl.u32 %v1449, 7
        %v1451 = vsub.s32 %v1448, %v1450
        %v1452 = vrot.slane %v1444, %v1451
        %v1454 = vunpack.c.l.s4 1934713408
        %v1455 = vunpack.c.0.s8 %v1454
        %v1456 = vlaneseq
        %v1457 = vshrl.u32 %v1456, 7
        %v1458 = vsub.s32 %v1455, %v1457
        %v1459 = vrot.slane %v1445, %v1458
        %v1460 = vcombine.low %v1404, %v1436
        %v1461 = vcombine.high %v1404, %v1436
        %v1462 = vcombine.low %v1411, %v1443
        %v1463 = vcombine.high %v1411, %v1443
        %v1464 = vcombine.low %v1420, %v1452
        %v1465 = vcombine.high %v1420, %v1452
        %v1466 = vcombine.low %v1427, %v1459
        %v1467 = vcombine.high %v1427, %v1459
        %v1468 = vcombine.low %v665, %v669
        %v1469 = vcombine.high %v665, %v669
        %v1471 = vunpack.c.l.s4 1983009808
        %v1472 = vunpack.c.0.s8 %v1471
        %v1473 = vlaneseq
        %v1474 = vshrl.u32 %v1473, 7
        %v1475 = vsub.s32 %v1472, %v1474
        %v1476 = vrot.slane %v1468, %v1475
        %v1478 = vunpack.c.l.s4 1983009808
        %v1479 = vunpack.c.0.s8 %v1478
        %v1480 = vlaneseq
        %v1481 = vshrl.u32 %v1480, 7
        %v1482 = vsub.s32 %v1479, %v1481
        %v1483 = vrot.slane %v1469, %v1482
        %v1484 = vcombine.low %v667, %v671
        %v1485 = vcombine.high %v667, %v671
        %v1487 = vunpack.c.l.s4 1983009808
        %v1488 = vunpack.c.0.s8 %v1487
        %v1489 = vlaneseq
        %v1490 = vshrl.u32 %v1489, 7
        %v1491 = vsub.s32 %v1488, %v1490
        %v1492 = vrot.slane %v1484, %v1491
        %v1494 = vunpack.c.l.s4 1983009808
        %v1495 = vunpack.c.0.s8 %v1494
        %v1496 = vlaneseq
        %v1497 = vshrl.u32 %v1496, 7
        %v1498 = vsub.s32 %v1495, %v1497
        %v1499 = vrot.slane %v1485, %v1498
        %v1500 = vcombine.low %v673, %v677
        %v1501 = vcombine.high %v673, %v677
        %v1503 = vunpack.c.l.s4 1983009808
        %v1504 = vunpack.c.0.s8 %v1503
        %v1505 = vlaneseq
        %v1506 = vshrl.u32 %v1505, 7
        %v1507 = vsub.s32 %v1504, %v1506
        %v1508 = vrot.slane %v1500, %v1507
        %v1510 = vunpack.c.l.s4 1983009808
        %v1511 = vunpack.c.0.s8 %v1510
        %v1512 = vlaneseq
        %v1513 = vshrl.u32 %v1512, 7
        %v1514 = vsub.s32 %v1511, %v1513
        %v1515 = vrot.slane %v1501, %v1514
        %v1516 = vcombine.low %v675, %v679
        %v1517 = vcombine.high %v675, %v679
        %v1519 = vunpack.c.l.s4 1983009808
        %v1520 = vunpack.c.0.s8 %v1519
        %v1521 = vlaneseq
        %v1522 = vshrl.u32 %v1521, 7
        %v1523 = vsub.s32 %v1520, %v1522
        %v1524 = vrot.slane %v1516, %v1523
        %v1526 = vunpack.c.l.s4 1983009808
        %v1527 = vunpack.c.0.s8 %v1526
        %v1528 = vlaneseq
        %v1529 = vshrl.u32 %v1528, 7
        %v1530 = vsub.s32 %v1527, %v1529
        %v1531 = vrot.slane %v1517, %v1530
        %v1532 = vcombine.low %v1476, %v1492
        %v1533 = vcombine.high %v1476, %v1492
        %v1535 = vunpack.c.l.s4 1934713408
        %v1536 = vunpack.c.0.s8 %v1535
        %v1537 = vlaneseq
        %v1538 = vshrl.u32 %v1537, 7
        %v1539 = vsub.s32 %v1536, %v1538
        %v1540 = vrot.slane %v1532, %v1539
        %v1542 = vunpack.c.l.s4 1934713408
        %v1543 = vunpack.c.0.s8 %v1542
        %v1544 = vlaneseq
        %v1545 = vshrl.u32 %v1544, 7
        %v1546 = vsub.s32 %v1543, %v1545
        %v1547 = vrot.slane %v1533, %v1546
        %v1548 = vcombine.low %v1483, %v1499
        %v1549 = vcombine.high %v1483, %v1499
        %v1551 = vunpack.c.l.s4 1934713408
        %v1552 = vunpack.c.0.s8 %v1551
        %v1553 = vlaneseq
        %v1554 = vshrl.u32 %v1553, 7
        %v1555 = vsub.s32 %v1552, %v1554
        %v1556 = vrot.slane %v1548, %v1555
        %v1558 = vunpack.c.l.s4 1934713408
        %v1559 = vunpack.c.0.s8 %v1558
        %v1560 = vlaneseq
        %v1561 = vshrl.u32 %v1560, 7
        %v1562 = vsub.s32 %v1559, %v1561
        %v1563 = vrot.slane %v1549, %v1562
        %v1564 = vcombine.low %v1508, %v1524
        %v1565 = vcombine.high %v1508, %v1524
        %v1567 = vunpack.c.l.s4 1934713408
        %v1568 = vunpack.c.0.s8 %v1567
        %v1569 = vlaneseq
        %v1570 = vshrl.u32 %v1569, 7
        %v1571 = vsub.s32 %v1568, %v1570
        %v1572 = vrot.slane %v1564, %v1571
        %v1574 = vunpack.c.l.s4 1934713408
        %v1575 = vunpack.c.0.s8 %v1574
        %v1576 = vlaneseq
        %v1577 = vshrl.u32 %v1576, 7
        %v1578 = vsub.s32 %v1575, %v1577
        %v1579 = vrot.slane %v1565, %v1578
        %v1580 = vcombine.low %v1515, %v1531
        %v1581 = vcombine.high %v1515, %v1531
        %v1583 = vunpack.c.l.s4 1934713408
        %v1584 = vunpack.c.0.s8 %v1583
        %v1585 = vlaneseq
        %v1586 = vshrl.u32 %v1585, 7
        %v1587 = vsub.s32 %v1584, %v1586
        %v1588 = vrot.slane %v1580, %v1587
        %v1590 = vunpack.c.l.s4 1934713408
        %v1591 = vunpack.c.0.s8 %v1590
        %v1592 = vlaneseq
        %v1593 = vshrl.u32 %v1592, 7
        %v1594 = vsub.s32 %v1591, %v1593
        %v1595 = vrot.slane %v1581, %v1594
        %v1596 = vcombine.low %v1540, %v1572
        %v1597 = vcombine.high %v1540, %v1572
        %v1598 = vcombine.low %v1547, %v1579
        %v1599 = vcombine.high %v1547, %v1579
        %v1600 = vcombine.low %v1556, %v1588
        %v1601 = vcombine.high %v1556, %v1588
        %v1602 = vcombine.low %v1563, %v1595
        %v1603 = vcombine.high %v1563, %v1595
        %v1604 = vcombine.low %v681, %v685
        %v1605 = vcombine.high %v681, %v685
        %v1607 = vunpack.c.l.s4 1983009808
        %v1608 = vunpack.c.0.s8 %v1607
        %v1609 = vlaneseq
        %v1610 = vshrl.u32 %v1609, 7
        %v1611 = vsub.s32 %v1608, %v1610
        %v1612 = vrot.slane %v1604, %v1611
        %v1614 = vunpack.c.l.s4 1983009808
        %v1615 = vunpack.c.0.s8 %v1614
        %v1616 = vlaneseq
        %v1617 = vshrl.u32 %v1616, 7
        %v1618 = vsub.s32 %v1615, %v1617
        %v1619 = vrot.slane %v1605, %v1618
        %v1620 = vcombine.low %v683, %v687
        %v1621 = vcombine.high %v683, %v687
        %v1623 = vunpack.c.l.s4 1983009808
        %v1624 = vunpack.c.0.s8 %v1623
        %v1625 = vlaneseq
        %v1626 = vshrl.u32 %v1625, 7
        %v1627 = vsub.s32 %v1624, %v1626
        %v1628 = vrot.slane %v1620, %v1627
        %v1630 = vunpack.c.l.s4 1983009808
        %v1631 = vunpack.c.0.s8 %v1630
        %v1632 = vlaneseq
        %v1633 = vshrl.u32 %v1632, 7
        %v1634 = vsub.s32 %v1631, %v1633
        %v1635 = vrot.slane %v1621, %v1634
        %v1636 = vcombine.low %v689, %v693
        %v1637 = vcombine.high %v689, %v693
        %v1639 = vunpack.c.l.s4 1983009808
        %v1640 = vunpack.c.0.s8 %v1639
        %v1641 = vlaneseq
        %v1642 = vshrl.u32 %v1641, 7
        %v1643 = vsub.s32 %v1640, %v1642
        %v1644 = vrot.slane %v1636, %v1643
        %v1646 = vunpack.c.l.s4 1983009808
        %v1647 = vunpack.c.0.s8 %v1646
        %v1648 = vlaneseq
        %v1649 = vshrl.u32 %v1648, 7
        %v1650 = vsub.s32 %v1647, %v1649
        %v1651 = vrot.slane %v1637, %v1650
        %v1652 = vcombine.low %v691, %v695
        %v1653 = vcombine.high %v691, %v695
        %v1655 = vunpack.c.l.s4 1983009808
        %v1656 = vunpack.c.0.s8 %v1655
        %v1657 = vlaneseq
        %v1658 = vshrl.u32 %v1657, 7
        %v1659 = vsub.s32 %v1656, %v1658
        %v1660 = vrot.slane %v1652, %v1659
        %v1662 = vunpack.c.l.s4 1983009808
        %v1663 = vunpack.c.0.s8 %v1662
        %v1664 = vlaneseq
        %v1665 = vshrl.u32 %v1664, 7
        %v1666 = vsub.s32 %v1663, %v1665
        %v1667 = vrot.slane %v1653, %v1666
        %v1668 = vcombine.low %v1612, %v1628
        %v1669 = vcombine.high %v1612, %v1628
        %v1671 = vunpack.c.l.s4 1934713408
        %v1672 = vunpack.c.0.s8 %v1671
        %v1673 = vlaneseq
        %v1674 = vshrl.u32 %v1673, 7
        %v1675 = vsub.s32 %v1672, %v1674
        %v1676 = vrot.slane %v1668, %v1675
        %v1678 = vunpack.c.l.s4 1934713408
        %v1679 = vunpack.c.0.s8 %v1678
        %v1680 = vlaneseq
        %v1681 = vshrl.u32 %v1680, 7
        %v1682 = vsub.s32 %v1679, %v1681
        %v1683 = vrot.slane %v1669, %v1682
        %v1684 = vcombine.low %v1619, %v1635
        %v1685 = vcombine.high %v1619, %v1635
        %v1687 = vunpack.c.l.s4 1934713408
        %v1688 = vunpack.c.0.s8 %v1687
        %v1689 = vlaneseq
        %v1690 = vshrl.u32 %v1689, 7
        %v1691 = vsub.s32 %v1688, %v1690
        %v1692 = vrot.slane %v1684, %v1691
        %v1694 = vunpack.c.l.s4 1934713408
        %v1695 = vunpack.c.0.s8 %v1694
        %v1696 = vlaneseq
        %v1697 = vshrl.u32 %v1696, 7
        %v1698 = vsub.s32 %v1695, %v1697
        %v1699 = vrot.slane %v1685, %v1698
        %v1700 = vcombine.low %v1644, %v1660
        %v1701 = vcombine.high %v1644, %v1660
        %v1703 = vunpack.c.l.s4 1934713408
        %v1704 = vunpack.c.0.s8 %v1703
        %v1705 = vlaneseq
        %v1706 = vshrl.u32 %v1705, 7
        %v1707 = vsub.s32 %v1704, %v1706
        %v1708 = vrot.slane %v1700, %v1707
        %v1710 = vunpack.c.l.s4 1934713408
        %v1711 = vunpack.c.0.s8 %v1710
        %v1712 = vlaneseq
        %v1713 = vshrl.u32 %v1712, 7
        %v1714 = vsub.s32 %v1711, %v1713
        %v1715 = vrot.slane %v1701, %v1714
        %v1716 = vcombine.low %v1651, %v1667
        %v1717 = vcombine.high %v1651, %v1667
        %v1719 = vunpack.c.l.s4 1934713408
        %v1720 = vunpack.c.0.s8 %v1719
        %v1721 = vlaneseq
        %v1722 = vshrl.u32 %v1721, 7
        %v1723 = vsub.s32 %v1720, %v1722
        %v1724 = vrot.slane %v1716, %v1723
        %v1726 = vunpack.c.l.s4 1934713408
        %v1727 = vunpack.c.0.s8 %v1726
        %v1728 = vlaneseq
        %v1729 = vshrl.u32 %v1728, 7
        %v1730 = vsub.s32 %v1727, %v1729
        %v1731 = vrot.slane %v1717, %v1730
        %v1732 = vcombine.low %v1676, %v1708
        %v1733 = vcombine.high %v1676, %v1708
        %v1734 = vcombine.low %v1683, %v1715
        %v1735 = vcombine.high %v1683, %v1715
        %v1736 = vcombine.low %v1692, %v1724
        %v1737 = vcombine.high %v1692, %v1724
        %v1738 = vcombine.low %v1699, %v1731
        %v1739 = vcombine.high %v1699, %v1731
        %v1740 = vcombine.low %v697, %v701
        %v1741 = vcombine.high %v697, %v701
        %v1743 = vunpack.c.l.s4 1983009808
        %v1744 = vunpack.c.0.s8 %v1743
        %v1745 = vlaneseq
        %v1746 = vshrl.u32 %v1745, 7
        %v1747 = vsub.s32 %v1744, %v1746
        %v1748 = vrot.slane %v1740, %v1747
        %v1750 = vunpack.c.l.s4 1983009808
        %v1751 = vunpack.c.0.s8 %v1750
        %v1752 = vlaneseq
        %v1753 = vshrl.u32 %v1752, 7
        %v1754 = vsub.s32 %v1751, %v1753
        %v1755 = vrot.slane %v1741, %v1754
        %v1756 = vcombine.low %v699, %v703
        %v1757 = vcombine.high %v699, %v703
        %v1759 = vunpack.c.l.s4 1983009808
        %v1760 = vunpack.c.0.s8 %v1759
        %v1761 = vlaneseq
        %v1762 = vshrl.u32 %v1761, 7
        %v1763 = vsub.s32 %v1760, %v1762
        %v1764 = vrot.slane %v1756, %v1763
        %v1766 = vunpack.c.l.s4 1983009808
        %v1767 = vunpack.c.0.s8 %v1766
        %v1768 = vlaneseq
        %v1769 = vshrl.u32 %v1768, 7
        %v1770 = vsub.s32 %v1767, %v1769
        %v1771 = vrot.slane %v1757, %v1770
        %v1772 = vcombine.low %v705, %v709
        %v1773 = vcombine.high %v705, %v709
        %v1775 = vunpack.c.l.s4 1983009808
        %v1776 = vunpack.c.0.s8 %v1775
        %v1777 = vlaneseq
        %v1778 = vshrl.u32 %v1777, 7
        %v1779 = vsub.s32 %v1776, %v1778
        %v1780 = vrot.slane %v1772, %v1779
        %v1782 = vunpack.c.l.s4 1983009808
        %v1783 = vunpack.c.0.s8 %v1782
        %v1784 = vlaneseq
        %v1785 = vshrl.u32 %v1784, 7
        %v1786 = vsub.s32 %v1783, %v1785
        %v1787 = vrot.slane %v1773, %v1786
        %v1788 = vcombine.low %v707, %v711
        %v1789 = vcombine.high %v707, %v711
        %v1791 = vunpack.c.l.s4 1983009808
        %v1792 = vunpack.c.0.s8 %v1791
        %v1793 = vlaneseq
        %v1794 = vshrl.u32 %v1793, 7
        %v1795 = vsub.s32 %v1792, %v1794
        %v1796 = vrot.slane %v1788, %v1795
        %v1798 = vunpack.c.l.s4 1983009808
        %v1799 = vunpack.c.0.s8 %v1798
        %v1800 = vlaneseq
        %v1801 = vshrl.u32 %v1800, 7
        %v1802 = vsub.s32 %v1799, %v1801
        %v1803 = vrot.slane %v1789, %v1802
        %v1804 = vcombine.low %v1748, %v1764
        %v1805 = vcombine.high %v1748, %v1764
        %v1807 = vunpack.c.l.s4 1934713408
        %v1808 = vunpack.c.0.s8 %v1807
        %v1809 = vlaneseq
        %v1810 = vshrl.u32 %v1809, 7
        %v1811 = vsub.s32 %v1808, %v1810
        %v1812 = vrot.slane %v1804, %v1811
        %v1814 = vunpack.c.l.s4 1934713408
        %v1815 = vunpack.c.0.s8 %v1814
        %v1816 = vlaneseq
        %v1817 = vshrl.u32 %v1816, 7
        %v1818 = vsub.s32 %v1815, %v1817
        %v1819 = vrot.slane %v1805, %v1818
        %v1820 = vcombine.low %v1755, %v1771
        %v1821 = vcombine.high %v1755, %v1771
        %v1823 = vunpack.c.l.s4 1934713408
        %v1824 = vunpack.c.0.s8 %v1823
        %v1825 = vlaneseq
        %v1826 = vshrl.u32 %v1825, 7
        %v1827 = vsub.s32 %v1824, %v1826
        %v1828 = vrot.slane %v1820, %v1827
        %v1830 = vunpack.c.l.s4 1934713408
        %v1831 = vunpack.c.0.s8 %v1830
        %v1832 = vlaneseq
        %v1833 = vshrl.u32 %v1832, 7
        %v1834 = vsub.s32 %v1831, %v1833
        %v1835 = vrot.slane %v1821, %v1834
        %v1836 = vcombine.low %v1780, %v1796
        %v1837 = vcombine.high %v1780, %v1796
        %v1839 = vunpack.c.l.s4 1934713408
        %v1840 = vunpack.c.0.s8 %v1839
        %v1841 = vlaneseq
        %v1842 = vshrl.u32 %v1841, 7
        %v1843 = vsub.s32 %v1840, %v1842
        %v1844 = vrot.slane %v1836, %v1843
        %v1846 = vunpack.c.l.s4 1934713408
        %v1847 = vunpack.c.0.s8 %v1846
        %v1848 = vlaneseq
        %v1849 = vshrl.u32 %v1848, 7
        %v1850 = vsub.s32 %v1847, %v1849
        %v1851 = vrot.slane %v1837, %v1850
        %v1852 = vcombine.low %v1787, %v1803
        %v1853 = vcombine.high %v1787, %v1803
        %v1855 = vunpack.c.l.s4 1934713408
        %v1856 = vunpack.c.0.s8 %v1855
        %v1857 = vlaneseq
        %v1858 = vshrl.u32 %v1857, 7
        %v1859 = vsub.s32 %v1856, %v1858
        %v1860 = vrot.slane %v1852, %v1859
        %v1862 = vunpack.c.l.s4 1934713408
        %v1863 = vunpack.c.0.s8 %v1862
        %v1864 = vlaneseq
        %v1865 = vshrl.u32 %v1864, 7
        %v1866 = vsub.s32 %v1863, %v1865
        %v1867 = vrot.slane %v1853, %v1866
        %v1868 = vcombine.low %v1812, %v1844
        %v1869 = vcombine.high %v1812, %v1844
        %v1870 = vcombine.low %v1819, %v1851
        %v1871 = vcombine.high %v1819, %v1851
        %v1872 = vcombine.low %v1828, %v1860
        %v1873 = vcombine.high %v1828, %v1860
        %v1874 = vcombine.low %v1835, %v1867
        %v1875 = vcombine.high %v1835, %v1867
        %v1876 = vcombine.low %v713, %v717
        %v1877 = vcombine.high %v713, %v717
        %v1879 = vunpack.c.l.s4 1983009808
        %v1880 = vunpack.c.0.s8 %v1879
        %v1881 = vlaneseq
        %v1882 = vshrl.u32 %v1881, 7
        %v1883 = vsub.s32 %v1880, %v1882
        %v1884 = vrot.slane %v1876, %v1883
        %v1886 = vunpack.c.l.s4 1983009808
        %v1887 = vunpack.c.0.s8 %v1886
        %v1888 = vlaneseq
        %v1889 = vshrl.u32 %v1888, 7
        %v1890 = vsub.s32 %v1887, %v1889
        %v1891 = vrot.slane %v1877, %v1890
        %v1892 = vcombine.low %v715, %v719
        %v1893 = vcombine.high %v715, %v719
        %v1895 = vunpack.c.l.s4 1983009808
        %v1896 = vunpack.c.0.s8 %v1895
        %v1897 = vlaneseq
        %v1898 = vshrl.u32 %v1897, 7
        %v1899 = vsub.s32 %v1896, %v1898
        %v1900 = vrot.slane %v1892, %v1899
        %v1902 = vunpack.c.l.s4 1983009808
        %v1903 = vunpack.c.0.s8 %v1902
        %v1904 = vlaneseq
        %v1905 = vshrl.u32 %v1904, 7
        %v1906 = vsub.s32 %v1903, %v1905
        %v1907 = vrot.slane %v1893, %v1906
        %v1908 = vcombine.low %v1884, %v1900
        %v1909 = vcombine.high %v1884, %v1900
        %v1911 = vunpack.c.l.s4 1934713408
        %v1912 = vunpack.c.0.s8 %v1911
        %v1913 = vlaneseq
        %v1914 = vshrl.u32 %v1913, 7
        %v1915 = vsub.s32 %v1912, %v1914
        %v1916 = vrot.slane %v1908, %v1915
        %v1918 = vunpack.c.l.s4 1934713408
        %v1919 = vunpack.c.0.s8 %v1918
        %v1920 = vlaneseq
        %v1921 = vshrl.u32 %v1920, 7
        %v1922 = vsub.s32 %v1919, %v1921
        %v1923 = vrot.slane %v1909, %v1922
        %v1924 = vcombine.low %v1891, %v1907
        %v1925 = vcombine.high %v1891, %v1907
        %v1927 = vunpack.c.l.s4 1934713408
        %v1928 = vunpack.c.0.s8 %v1927
        %v1929 = vlaneseq
        %v1930 = vshrl.u32 %v1929, 7
        %v1931 = vsub.s32 %v1928, %v1930
        %v1932 = vrot.slane %v1924, %v1931
        %v1934 = vunpack.c.l.s4 1934713408
        %v1935 = vunpack.c.0.s8 %v1934
        %v1936 = vlaneseq
        %v1937 = vshrl.u32 %v1936, 7
        %v1938 = vsub.s32 %v1935, %v1937
        %v1939 = vrot.slane %v1925, %v1938
        %v1940 = vcombine.high %v1916, 0.0
        %v1941 = vcombine.high %v1923, 0.0
        %v1942 = vcombine.high %v1932, 0.0
        %v1943 = vcombine.high %v1939, 0.0
        %1949 = vrot.lane.b32.xlu0 %v849, 16
        %v1950 = vpop.permute.xlu0 %1949
        %1951 = vrot.lane.b32.xlu0 %v985, 16
        %v1952 = vpop.permute.xlu0 %1951
        %1953 = vrot.lane.b32.xlu0 %v1121, 16
        %v1954 = vpop.permute.xlu0 %1953
        %1955 = vrot.lane.b32.xlu0 %v1257, 16
        %v1956 = vpop.permute.xlu0 %1955
        %1957 = vrot.lane.b32.xlu0 %v1328, 16
        %v1958 = vpop.permute.xlu0 %1957
        %1969 = vrot.lane.b32.xlu0 %v850, 32
        %v1970 = vpop.permute.xlu0 %1969
        %1971 = vrot.lane.b32.xlu0 %v986, 32
        %v1972 = vpop.permute.xlu0 %1971
        %1973 = vrot.lane.b32.xlu0 %v1122, 32
        %v1974 = vpop.permute.xlu0 %1973
        %1975 = vrot.lane.b32.xlu0 %v1258, 32
        %v1976 = vpop.permute.xlu0 %1975
        %1977 = vrot.lane.b32.xlu0 %v1311, 32
        %v1978 = vpop.permute.xlu0 %1977
        %1989 = vrot.lane.b32.xlu0 %v851, 48
        %v1990 = vpop.permute.xlu0 %1989
        %1991 = vrot.lane.b32.xlu0 %v987, 48
        %v1992 = vpop.permute.xlu0 %1991
        %1993 = vrot.lane.b32.xlu0 %v1123, 48
        %v1994 = vpop.permute.xlu0 %1993
        %1995 = vrot.lane.b32.xlu0 %v1259, 48
        %v1996 = vpop.permute.xlu0 %1995
        %1997 = vrot.lane.b32.xlu0 %v1329, 48
        %v1998 = vpop.permute.xlu0 %1997
        %2009 = vrot.lane.b32.xlu0 %v852, 64
        %v2010 = vpop.permute.xlu0 %2009
        %2011 = vrot.lane.b32.xlu0 %v988, 64
        %v2012 = vpop.permute.xlu0 %2011
        %2013 = vrot.lane.b32.xlu0 %v1124, 64
        %v2014 = vpop.permute.xlu0 %2013
        %2015 = vrot.lane.b32.xlu0 %v1260, 64
        %v2016 = vpop.permute.xlu0 %2015
        %2017 = vrot.lane.b32.xlu0 %v1320, 64
        %v2018 = vpop.permute.xlu0 %2017
        %2029 = vrot.lane.b32.xlu0 %v853, 80
        %v2030 = vpop.permute.xlu0 %2029
        %2031 = vrot.lane.b32.xlu0 %v989, 80
        %v2032 = vpop.permute.xlu0 %2031
        %2033 = vrot.lane.b32.xlu0 %v1125, 80
        %v2034 = vpop.permute.xlu0 %2033
        %2035 = vrot.lane.b32.xlu0 %v1261, 80
        %v2036 = vpop.permute.xlu0 %2035
        %2037 = vrot.lane.b32.xlu0 %v1330, 80
        %v2038 = vpop.permute.xlu0 %2037
        %2049 = vrot.lane.b32.xlu0 %v854, 96
        %v2050 = vpop.permute.xlu0 %2049
        %2051 = vrot.lane.b32.xlu0 %v990, 96
        %v2052 = vpop.permute.xlu0 %2051
        %2053 = vrot.lane.b32.xlu0 %v1126, 96
        %v2054 = vpop.permute.xlu0 %2053
        %2055 = vrot.lane.b32.xlu0 %v1262, 96
        %v2056 = vpop.permute.xlu0 %2055
        %2057 = vrot.lane.b32.xlu0 %v1327, 96
        %v2058 = vpop.permute.xlu0 %2057
        %2069 = vrot.lane.b32.xlu0 %v855, 112
        %v2070 = vpop.permute.xlu0 %2069
        %2071 = vrot.lane.b32.xlu0 %v991, 112
        %v2072 = vpop.permute.xlu0 %2071
        %2073 = vrot.lane.b32.xlu0 %v1127, 112
        %v2074 = vpop.permute.xlu0 %2073
        %2075 = vrot.lane.b32.xlu0 %v1263, 112
        %v2076 = vpop.permute.xlu0 %2075
        %2077 = vrot.lane.b32.xlu0 %v1331, 112
        %v2078 = vpop.permute.xlu0 %2077
        %2089 = vrot.lane.b32.xlu0 %v1461, 16
        %v2090 = vpop.permute.xlu0 %2089
        %2091 = vrot.lane.b32.xlu0 %v1597, 16
        %v2092 = vpop.permute.xlu0 %2091
        %2093 = vrot.lane.b32.xlu0 %v1733, 16
        %v2094 = vpop.permute.xlu0 %2093
        %2095 = vrot.lane.b32.xlu0 %v1869, 16
        %v2096 = vpop.permute.xlu0 %2095
        %2097 = vrot.lane.b32.xlu0 %v1940, 16
        %v2098 = vpop.permute.xlu0 %2097
        %2109 = vrot.lane.b32.xlu0 %v1462, 32
        %v2110 = vpop.permute.xlu0 %2109
        %2111 = vrot.lane.b32.xlu0 %v1598, 32
        %v2112 = vpop.permute.xlu0 %2111
        %2113 = vrot.lane.b32.xlu0 %v1734, 32
        %v2114 = vpop.permute.xlu0 %2113
        %2115 = vrot.lane.b32.xlu0 %v1870, 32
        %v2116 = vpop.permute.xlu0 %2115
        %2117 = vrot.lane.b32.xlu0 %v1923, 32
        %v2118 = vpop.permute.xlu0 %2117
        %2129 = vrot.lane.b32.xlu0 %v1463, 48
        %v2130 = vpop.permute.xlu0 %2129
        %2131 = vrot.lane.b32.xlu0 %v1599, 48
        %v2132 = vpop.permute.xlu0 %2131
        %2133 = vrot.lane.b32.xlu0 %v1735, 48
        %v2134 = vpop.permute.xlu0 %2133
        %2135 = vrot.lane.b32.xlu0 %v1871, 48
        %v2136 = vpop.permute.xlu0 %2135
        %2137 = vrot.lane.b32.xlu0 %v1941, 48
        %v2138 = vpop.permute.xlu0 %2137
        %2149 = vrot.lane.b32.xlu0 %v1464, 64
        %v2150 = vpop.permute.xlu0 %2149
        %2151 = vrot.lane.b32.xlu0 %v1600, 64
        %v2152 = vpop.permute.xlu0 %2151
        %2153 = vrot.lane.b32.xlu0 %v1736, 64
        %v2154 = vpop.permute.xlu0 %2153
        %2155 = vrot.lane.b32.xlu0 %v1872, 64
        %v2156 = vpop.permute.xlu0 %2155
        %2157 = vrot.lane.b32.xlu0 %v1932, 64
        %v2158 = vpop.permute.xlu0 %2157
        %2169 = vrot.lane.b32.xlu0 %v1465, 80
        %v2170 = vpop.permute.xlu0 %2169
        %2171 = vrot.lane.b32.xlu0 %v1601, 80
        %v2172 = vpop.permute.xlu0 %2171
        %2173 = vrot.lane.b32.xlu0 %v1737, 80
        %v2174 = vpop.permute.xlu0 %2173
        %2175 = vrot.lane.b32.xlu0 %v1873, 80
        %v2176 = vpop.permute.xlu0 %2175
        %2177 = vrot.lane.b32.xlu0 %v1942, 80
        %v2178 = vpop.permute.xlu0 %2177
        %2189 = vrot.lane.b32.xlu0 %v1466, 96
        %v2190 = vpop.permute.xlu0 %2189
        %2191 = vrot.lane.b32.xlu0 %v1602, 96
        %v2192 = vpop.permute.xlu0 %2191
        %2193 = vrot.lane.b32.xlu0 %v1738, 96
        %v2194 = vpop.permute.xlu0 %2193
        %2195 = vrot.lane.b32.xlu0 %v1874, 96
        %v2196 = vpop.permute.xlu0 %2195
        %2197 = vrot.lane.b32.xlu0 %v1939, 96
        %v2198 = vpop.permute.xlu0 %2197
        %2209 = vrot.lane.b32.xlu0 %v1467, 112
        %v2210 = vpop.permute.xlu0 %2209
        %2211 = vrot.lane.b32.xlu0 %v1603, 112
        %v2212 = vpop.permute.xlu0 %2211
        %2213 = vrot.lane.b32.xlu0 %v1739, 112
        %v2214 = vpop.permute.xlu0 %2213
        %2215 = vrot.lane.b32.xlu0 %v1875, 112
        %v2216 = vpop.permute.xlu0 %2215
        %2217 = vrot.lane.b32.xlu0 %v1943, 112
        %v2218 = vpop.permute.xlu0 %2217
        %v2224 = vsel %vm311, %v848, %v1950
        %v2225 = vsel %vm311, %v984, %v1952
        %v2226 = vsel %vm311, %v1120, %v1954
        %v2227 = vsel %vm311, %v1256, %v1956
        %v2228 = vsel %vm311, %v1304, %v1958
        %vm2229 = vcmask 261120
        %v2230 = vsel %vm2229, %v2224, %v1970
        %v2231 = vsel %vm2229, %v2225, %v1972
        %v2232 = vsel %vm2229, %v2226, %v1974
        %v2233 = vsel %vm2229, %v2227, %v1976
        %v2234 = vsel %vm2229, %v2228, %v1978
        %vm2235 = vcmask 392192
        %v2236 = vsel %vm2235, %v2230, %v1990
        %v2237 = vsel %vm2235, %v2231, %v1992
        %v2238 = vsel %vm2235, %v2232, %v1994
        %v2239 = vsel %vm2235, %v2233, %v1996
        %v2240 = vsel %vm2235, %v2234, %v1998
        %vm2241 = vcmask 523264
        %v2242 = vsel %vm2241, %v2236, %v2010
        %v2243 = vsel %vm2241, %v2237, %v2012
        %v2244 = vsel %vm2241, %v2238, %v2014
        %v2245 = vsel %vm2241, %v2239, %v2016
        %v2246 = vsel %vm2241, %v2240, %v2018
        %vm2247 = vcmask 654336
        %v2248 = vsel %vm2247, %v2242, %v2030
        %v2249 = vsel %vm2247, %v2243, %v2032
        %v2250 = vsel %vm2247, %v2244, %v2034
        %v2251 = vsel %vm2247, %v2245, %v2036
        %v2252 = vsel %vm2247, %v2246, %v2038
        %vm2253 = vcmask 785408
        %v2254 = vsel %vm2253, %v2248, %v2050
        %v2255 = vsel %vm2253, %v2249, %v2052
        %v2256 = vsel %vm2253, %v2250, %v2054
        %v2257 = vsel %vm2253, %v2251, %v2056
        %v2258 = vsel %vm2253, %v2252, %v2058
        %vm2259 = vcmask 916480
        %v2260 = vsel %vm2259, %v2254, %v2070
        %v2261 = vsel %vm2259, %v2255, %v2072
        %v2262 = vsel %vm2259, %v2256, %v2074
        %v2263 = vsel %vm2259, %v2257, %v2076
        %v2264 = vsel %vm2259, %v2258, %v2078
        %v2265 = vsel %vm311, %v1460, %v2090
        %v2266 = vsel %vm311, %v1596, %v2092
        %v2267 = vsel %vm311, %v1732, %v2094
        %v2268 = vsel %vm311, %v1868, %v2096
        %v2269 = vsel %vm311, %v1916, %v2098
        %v2270 = vsel %vm2229, %v2265, %v2110
        %v2271 = vsel %vm2229, %v2266, %v2112
        %v2272 = vsel %vm2229, %v2267, %v2114
        %v2273 = vsel %vm2229, %v2268, %v2116
        %v2274 = vsel %vm2229, %v2269, %v2118
        %v2275 = vsel %vm2235, %v2270, %v2130
        %v2276 = vsel %vm2235, %v2271, %v2132
        %v2277 = vsel %vm2235, %v2272, %v2134
        %v2278 = vsel %vm2235, %v2273, %v2136
        %v2279 = vsel %vm2235, %v2274, %v2138
        %v2280 = vsel %vm2241, %v2275, %v2150
        %v2281 = vsel %vm2241, %v2276, %v2152
        %v2282 = vsel %vm2241, %v2277, %v2154
        %v2283 = vsel %vm2241, %v2278, %v2156
        %v2284 = vsel %vm2241, %v2279, %v2158
        %v2285 = vsel %vm2247, %v2280, %v2170
        %v2286 = vsel %vm2247, %v2281, %v2172
        %v2287 = vsel %vm2247, %v2282, %v2174
        %v2288 = vsel %vm2247, %v2283, %v2176
        %v2289 = vsel %vm2247, %v2284, %v2178
        %v2290 = vsel %vm2253, %v2285, %v2190
        %v2291 = vsel %vm2253, %v2286, %v2192
        %v2292 = vsel %vm2253, %v2287, %v2194
        %v2293 = vsel %vm2253, %v2288, %v2196
        %v2294 = vsel %vm2253, %v2289, %v2198
        %v2295 = vsel %vm2259, %v2290, %v2210
        %v2296 = vsel %vm2259, %v2291, %v2212
        %v2297 = vsel %vm2259, %v2292, %v2214
        %v2298 = vsel %vm2259, %v2293, %v2216
        %v2299 = vsel %vm2259, %v2294, %v2218
        %v2300 = vpack.c.bf16 %v2261, %v2260
        %v2301 = vpack.c.bf16 %v2296, %v2295
        %v2302 = vpack.c.bf16 %v2263, %v2262
        %v2303 = vpack.c.bf16 %v2298, %v2297
        %v2304 = vpack.c.bf16 %v2264, %v2264
        %v2305 = vpack.c.bf16 %v2299, %v2299
        %v2306 = vld [vmem:[%s1] sm:$0xf]
        %vm2307 = vcmask 293888
        %v2309 = vsel %vm2307, %v2306, 0
        %vm2311 = vcmask 1041408
        %v2313 = vsel %vm2311, %v2304, 0
        %v2316 = vsel %vm2311, %v2305, 0
        %2318 = vmatprep.subr.bf16.mxu0 0
        %2319 = vmatpush1.bf16.msra.mxu0 0
        %2320 = vmatprep.subr.bf16.mxu0 0
        %2321 = vmatpush1.bf16.msra.mxu0 0
        %2322 = vmatprep.subr.bf16.mxu0 0
        %2323 = vmatpush1.bf16.msra.mxu0 0
        %2324 = vmatprep.subr.bf16.mxu0 0
        %2325 = vmatpush1.bf16.msra.mxu0 0
        %2326 = vmatprep.subr.bf16.mxu0 0
        %2327 = vmatpush1.bf16.msra.mxu0 0
        %2328 = vmatprep.subr.bf16.mxu0 %v2316
        %2329 = vmatpush1.bf16.msra.mxu0 %v2313
        %2330 = vmatprep.subr.bf16.mxu0 %v2303
        %2331 = vmatpush1.bf16.msra.mxu0 %v2302
        %2332 = vmatprep.subr.bf16.mxu0 %v2301
        %2333 = vmatpush1.bf16.msra.mxu0 %v2300
        %2334 = vmatprep.subr.bf16.mxu0 0
        %2335 = vmatpush2.bf16.msra.mxu0 0
        %2336 = vmatprep.subr.bf16.mxu0 0
        %2337 = vmatpush2.bf16.msra.mxu0 0
        %2338 = vmatprep.subr.bf16.mxu0 0
        %2339 = vmatpush2.bf16.msra.mxu0 0
        %2340 = vmatprep.subr.bf16.mxu0 0
        %2341 = vmatpush2.bf16.msra.mxu0 0
        %2342 = vmatprep.subr.bf16.mxu0 0
        %2343 = vmatpush2.bf16.msra.mxu0 0
        %2344 = vmatprep.subr.bf16.mxu0 0
        %2345 = vmatpush2.bf16.msra.mxu0 0
        %2346 = vmatprep.subr.bf16.mxu0 0
        %2347 = vmatpush2.bf16.msra.mxu0 0
        %2348 = vmatprep.subr.bf16.mxu0 0
        %2349 = vmatpush2.bf16.msra.mxu0 0
        %2350 = vmatprep.mubr.bf16.mxu0 0
        %2351 = vmatmul.mubr.bf16.gmra.mxu0 %v2309
        %v2352 = vpop.f32.mrf.mxu0
        %v2353 = vadd.f32 0.0, %v2352
        %v2354 = vpop.f32.mrf.mxu0
        %v2355 = vadd.f32 0.0, %v2354
        %v2356 = vpop.f32.mrf.mxu0
        %v2357 = vpop.f32.mrf.mxu0
        %2358 = vdwg.mxu0
        %v2359 = vld [vmem:[%s2] sm:$0xff]
        %2361 = vset.pattern.permute.xlu0 0
        %2362 = vperm.xlu0 %2361, %v2359
        %v2363 = vpop.permute.xlu0 %2362
        %v2365 = vmul.f32 %v2353, %v2363
        %v2366 = vmul.f32 %v2355, %v2363
        %v2367 = vld [vmem:[%s3] sm:$0xff]
        %2369 = vset.pattern.permute.xlu0 0
        %2370 = vperm.xlu0 %2369, %v2367
        %v2371 = vpop.permute.xlu0 %2370
        %v2373 = vadd.f32 %v2365, %v2371
        %v2374 = vadd.f32 %v2366, %v2371
        %vm2375 = vcmp.ge.f32.partialorder %v2373, 0.0
        %vm2376 = vcmp.ge.f32.partialorder %v2374, 0.0
        %v2377 = vmul.f32 %v2373, 0.1
        %v2378 = vmul.f32 %v2374, 0.1
        %v2379 = vsel %vm2375, %v2373, %v2377
        %v2380 = vsel %vm2376, %v2374, %v2378
        %2381 = vst [vmem:[%s215] sm:$0xff] %v2379
        %2382 = vst [vmem:[%s215 + $0x8] sm:$0xff] %v2380
        %s2383 = sand.u32 %s118, 1
        %s2384 = scalar_lea.sflag [#allocation6], %s2383
        %s2385 = sand.u32 %s118, 1
        %s2386 = smul.addr %s2385, 16
        %s2387 = scalar_lea.vmem [#allocation7], %s2386
        // Predicated region
        $region41: #{tpu_custom_call.1} parent=35 // pred_check
          %p2388 = pneg %p128
        $region42: #{tpu_custom_call.1} parent=35 // pred_check_branch
          %2390 = sbr.rel (%p2388) target = $region44
        $region43: #{tpu_custom_call.1} parent=35 // pred_region
          %s2392 = ssub.s32 256, 256
          %2393 = vsyncadd %s2384, %s2392
          %s2394 = smul.addr %s21, 2
          %s2395 = smul.addr %s2394, 128
          %s2396 = scalar_lea.hbm %s4, %s2395
          %s2398 = sshll.u32 %s2387, 4
          %s2399 = int_to_ptr.vmem [resolvable:$true] %s2398
          %2401 = dma.vmem_to_hbm [thread:$0]  %s2399, 256, %s2396, %s2384
        $region44: #{tpu_custom_call.1} parent=35 // pred_fallthru
          _
      $region36: #{tpu_custom_call.1} parent=5 // pred_fallthru
        _
      %p2402 = scmp.le.s32.totalorder 2, %s16
      // Predicated region
      $region45: #{tpu_custom_call.1} parent=5 // pred_check
        %p2403 = pneg %p2402
      $region46: #{tpu_custom_call.1} parent=5 // pred_check_branch
        %2405 = sbr.rel (%p2403) target = $region48
      $region47: #{tpu_custom_call.1} parent=5 // pred_region
        %s2406 = ssub.s32 %s16, 2
        // Predicated region
        $region49: #{tpu_custom_call.1} parent=47 // pred_check
          %p2407 = pneg %p134
        $region50: #{tpu_custom_call.1} parent=47 // pred_check_branch
          %2409 = sbr.rel (%p2407) target = $region52
        $region51: #{tpu_custom_call.1} parent=47 // pred_region
          %s2410 = sand.u32 %s119, 1
          %s2411 = scalar_lea.sflag [#allocation6], %s2410
          %s2412 = sand.u32 %s119, 1
          %s2413 = smul.addr %s2412, 16
          %s2414 = scalar_lea.vmem [#allocation7], %s2413
          %2415 = dma.done %s2411, 256
        $region52: #{tpu_custom_call.1} parent=47 // pred_fallthru
          _
      $region48: #{tpu_custom_call.1} parent=5 // pred_fallthru
        _
    $region6: #{tpu_custom_call.1} parent=1 // loop_footer
      %s20 = sadd.s32 1, %s16
    $region7: #{tpu_custom_call.1} parent=1 // loop_footer_branch
      %15 = sbr.rel target = $region3
    $region8: #{tpu_custom_call.1} parent=1 // loop_exit
      _
    %2416 = vsyncpa [#allocation5], 1
    %s2417 = scalar_lea.sflag [#allocation5], 1
    %2418 = vsyncpa %s2417, 1
    %2419 = vsyncpa [#allocation6], 1
    %s2420 = scalar_lea.sflag [#allocation6], 1
    %2421 = vsyncpa %s2420, 1

</llo_original>
